<compile_context>
chip_gen: v7x
topology: tpu7x:2x2x1
jax: 0.10.0
libtpu: 0.0.40
codegen_flags: <defaults>
</compile_context>

<pallas_src>
import functools

import numpy as np
import jax
import jax.numpy as jnp
from jax import lax
from jax.experimental import pallas as pl
from jax.experimental.pallas import tpu as pltpu

EPS = 1e-5


# ----------------------------------------------------------------------------
# Fused BasicBlock kernel
# ----------------------------------------------------------------------------
def _make_block_kernel(*, stride, Ho, Wo, Qh, Qw, Cin, Cout, has_downsample):
  """conv1(3x3,s)+bn1+relu -> conv2(3x3,1)+bn2 -> (+ downsample(identity)) -> relu."""
  s = stride

  def kernel(*refs):
    if has_downsample:
      (xph_ref, w1_ref, s1_ref, b1_ref, w2_ref, s2_ref, b2_ref,
       wd_ref, sd_ref, bd_ref, out_ref, y1p_ref) = refs
    else:
      (xph_ref, w1_ref, s1_ref, b1_ref, w2_ref, s2_ref, b2_ref,
       out_ref, y1p_ref) = refs

    # Phase-stacked, zero-padded input for this batch element:
    #   xv[p*Qh + q, r, :] = padded_x[s*q + p_h, s*r + p_w, :],  p = p_h*s + p_w
    # so every 3x3 tap of the stride-s conv is a unit-stride static slice.
    # Slicing / reshaping is done in fp32 (clean (8,128) tiling, Wo % 8 == 0).
    xv = xph_ref[0].astype(jnp.float32)          # [s*s*Qh, Qw, Cin]

    # ---- conv1 (stride folded into phase indexing) + bn1 + relu ------------
    taps = []
    for kh in range(3):
      for kw in range(3):
        ph = (kh % s) * s + (kw % s)
        r0 = ph * Qh + kh // s
        c0 = kw // s
        taps.append(xv[r0:r0 + Ho, c0:c0 + Wo, :].reshape(Ho * Wo, Cin))
    # im2col slab -> ONE MXU matmul with K = 9*Cin (bf16 in, fp32 accumulate).
    patches = jnp.concatenate(taps, axis=-1).astype(jnp.bfloat16)   # [Ho*Wo, 9*Cin]
    y1 = jnp.dot(patches, w1_ref[...], preferred_element_type=jnp.float32)
    y1 = y1 * s1_ref[0] + b1_ref[0]              # folded BN (fp32 epilogue)
    y1 = jnp.maximum(y1, 0.0)                    # [Ho*Wo, Cout]

    # ---- zero-pad conv1 output in VMEM scratch (no HBM pad round trip) -----
    y1p_ref[...] = jnp.zeros((Ho + 2, Wo + 2, Cout), jnp.float32)
    y1p_ref[1:Ho + 1, 1:Wo + 1, :] = y1.reshape(Ho, Wo, Cout)
    y1p = y1p_ref[...]

    # ---- conv2 (stride 1) + bn2 --------------------------------------------
    taps2 = []
    for kh in range(3):
      for kw in range(3):
        taps2.append(y1p[kh:kh + Ho, kw:kw + Wo, :].reshape(Ho * Wo, Cout))
    p2 = jnp.concatenate(taps2, axis=-1).astype(jnp.bfloat16)       # [Ho*Wo, 9*Cout]
    y2 = jnp.dot(p2, w2_ref[...], preferred_element_type=jnp.float32)
    y2 = y2 * s2_ref[0] + b2_ref[0]

    # ---- identity / fused 1x1 downsample + residual add + relu -------------
    # identity[i, j] = x[s*i, s*j] is itself one of the stored phases.
    rho = 1 % s
    d0 = (1 - rho) // s
    phi = rho * s + rho
    idv = xv[phi * Qh + d0: phi * Qh + d0 + Ho, d0:d0 + Wo, :].reshape(Ho * Wo, Cin)
    if has_downsample:
      idy = jnp.dot(idv.astype(jnp.bfloat16), wd_ref[...],
                    preferred_element_type=jnp.float32)
      idy = idy * sd_ref[0] + bd_ref[0]
    else:
      idy = idv                                   # Cin == Cout

    out = jnp.maximum(y2 + idy, 0.0)
    out_ref[...] = out.reshape(1, Ho, Wo, Cout)

  return kernel


# ----------------------------------------------------------------------------
# Wrapper
# ----------------------------------------------------------------------------
def _phase_stack(x_nhwc, stride):
  """Zero-pad (pad=1) and polyphase-decompose so that every tap of a stride-s
  3x3 conv (and the strided identity) is a unit-stride slice in the kernel.
  Returns [N, s*s*Qh, Qw, C], Qh, Qw."""
  N, H, W, C = x_nhwc.shape
  s = stride
  xt = jnp.pad(x_nhwc, ((0, 0), (1, 1), (1, 1), (0, 0)))
  Qh = (H + 1) // s + 1
  Qw = (W + 1) // s + 1
  phases = []
  for rh in range(s):
    for rw in range(s):
      a = xt[:, rh::s, rw::s, :]
      a = jnp.pad(a, ((0, 0), (0, Qh - a.shape[1]), (0, Qw - a.shape[2]), (0, 0)))
      phases.append(a)
  return jnp.concatenate(phases, axis=1), Qh, Qw


def fold_bn(conv_bias, gamma, beta, mean, var, eps=EPS):
  """BN(conv(x)+b) == conv(x)*scale + bias with folded scale/bias (inference)."""
  scale = gamma / jnp.sqrt(var + eps)
  bias = beta + (conv_bias - mean) * scale
  return scale, bias


def basic_block_pallas(x_nchw, p, stride, has_downsample):
  x = jnp.transpose(x_nchw, (0, 2, 3, 1)).astype(jnp.float32)   # NCHW -> NHWC
  N, H, W, Cin = x.shape
  Cout = p['conv1_w'].shape[0]
  s = stride
  assert H % s == 0 and W % s == 0
  if not has_downsample:
    assert s == 1 and Cin == Cout, "identity skip needs stride=1 and Cin==Cout"
  Ho, Wo = H // s, W // s
  assert Wo % 8 == 0, "kernel assumes Wo is a multiple of 8 (sublane-aligned)"

  xph, Qh, Qw = _phase_stack(x, s)
  xph = xph.astype(jnp.bfloat16)                 # half the input DMA bytes

  # HWIO-flattened conv weights (row index = (kh*3+kw)*C + c), bf16 for the MXU.
  w1 = jnp.transpose(p['conv1_w'], (2, 3, 1, 0)).reshape(9 * Cin, Cout).astype(jnp.bfloat16)
  w2 = jnp.transpose(p['conv2_w'], (2, 3, 1, 0)).reshape(9 * Cout, Cout).astype(jnp.bfloat16)
  s1, b1 = fold_bn(p['conv1_b'], *p['bn1'])
  s2, b2 = fold_bn(p['conv2_b'], *p['bn2'])

  kernel = _make_block_kernel(stride=s, Ho=Ho, Wo=Wo, Qh=Qh, Qw=Qw,
                              Cin=Cin, Cout=Cout, has_downsample=has_downsample)

  in_specs = [
      pl.BlockSpec((1, s * s * Qh, Qw, Cin), lambda n: (n, 0, 0, 0)),
      pl.BlockSpec((9 * Cin, Cout), lambda n: (0, 0)),
      pl.BlockSpec((1, Cout), lambda n: (0, 0)),
      pl.BlockSpec((1, Cout), lambda n: (0, 0)),
      pl.BlockSpec((9 * Cout, Cout), lambda n: (0, 0)),
      pl.BlockSpec((1, Cout), lambda n: (0, 0)),
      pl.BlockSpec((1, Cout), lambda n: (0, 0)),
  ]
  args = [xph, w1, s1.reshape(1, Cout), b1.reshape(1, Cout),
          w2, s2.reshape(1, Cout), b2.reshape(1, Cout)]

  if has_downsample:
    wd = jnp.transpose(p['convd_w'][:, :, 0, 0], (1, 0)).astype(jnp.bfloat16)
    sd, bd = fold_bn(p['convd_b'], *p['bnd'])
    in_specs += [
        pl.BlockSpec((Cin, Cout), lambda n: (0, 0)),
        pl.BlockSpec((1, Cout), lambda n: (0, 0)),
        pl.BlockSpec((1, Cout), lambda n: (0, 0)),
    ]
    args += [wd, sd.reshape(1, Cout), bd.reshape(1, Cout)]

  out = pl.pallas_call(
      kernel,
      out_shape=jax.ShapeDtypeStruct((N, Ho, Wo, Cout), jnp.float32),
      grid_spec=pltpu.PrefetchScalarGridSpec(
          num_scalar_prefetch=0,
          grid=(N,),
          in_specs=in_specs,
          out_specs=pl.BlockSpec((1, Ho, Wo, Cout), lambda n: (n, 0, 0, 0)),
          scratch_shapes=[pltpu.VMEM((Ho + 2, Wo + 2, Cout), jnp.float32)]),
      compiler_params=pltpu.CompilerParams(
          dimension_semantics=("parallel",),
          vmem_limit_bytes=32 * 1024 * 1024),
  )(*args)

  return jnp.transpose(out, (0, 3, 1, 2))        # NHWC -> NCHW


# ----------------------------------------------------------------------------
# Pure-JAX reference (same math, lax.conv) for verification
# ----------------------------------------------------------------------------
def ref_basic_block(x, p, stride, has_downsample):
  def conv(x, w, b, s, pad):
    y = lax.conv_general_dilated(
        x, w, (s, s), [(pad, pad), (pad, pad)],
        dimension_numbers=('NCHW', 'OIHW', 'NCHW'))
    return y + b[None, :, None, None]

  def bn(x, gamma, beta, mean, var):
    sc = (gamma / jnp.sqrt(var + EPS))[None, :, None, None]
    return (x - mean[None, :, None, None]) * sc + beta[None, :, None, None]

  identity = x
  y = jax.nn.relu(bn(conv(x, p['conv1_w'], p['conv1_b'], stride, 1), *p['bn1']))
  y = bn(conv(y, p['conv2_w'], p['conv2_b'], 1, 1), *p['bn2'])
  if has_downsample:
    identity = bn(conv(identity, p['convd_w'], p['convd_b'], stride, 0),
                  *p['bnd'])
  return jax.nn.relu(y + identity)


# ----------------------------------------------------------------------------
# Deterministic parameter init (synthetic; shapes follow BasicBlock.__init__)
# ----------------------------------------------------------------------------
def init_params(key, cin, cout):
  ks = jax.random.split(key, 9)

  def bn_params(k):
    k1, k2, k3, k4 = jax.random.split(k, 4)
    gamma = 1.0 + 0.1 * jax.random.normal(k1, (cout,), jnp.float32)
    beta = 0.1 * jax.random.normal(k2, (cout,), jnp.float32)
    mean = 0.1 * jax.random.normal(k3, (cout,), jnp.float32)
    var = 0.5 + jax.random.uniform(k4, (cout,), jnp.float32)
    return (gamma, beta, mean, var)

  return {
      'conv1_w': 0.2 * jax.random.normal(ks[0], (cout, cin, 3, 3), jnp.float32),
      'conv1_b': 0.1 * jax.random.normal(ks[1], (cout,), jnp.float32),
      'bn1': bn_params(ks[2]),
      'conv2_w': 0.2 * jax.random.normal(ks[3], (cout, cout, 3, 3), jnp.float32),
      'conv2_b': 0.1 * jax.random.normal(ks[4], (cout,), jnp.float32),
      'bn2': bn_params(ks[5]),
      'convd_w': 0.2 * jax.random.normal(ks[6], (cout, cin, 1, 1), jnp.float32),
      'convd_b': 0.1 * jax.random.normal(ks[7], (cout,), jnp.float32),
      'bnd': bn_params(ks[8]),
  }


if __name__ == "__main__":
  key = jax.random.PRNGKey(0)
  kx, kp, kx2, kp2 = jax.random.split(key, 4)

  N, Cin, H, W = 2, 4, 16, 16
  Cout = 8

  # Case 1: first block of a stage — stride 2 + 1x1 downsample on the skip.
  x = jax.random.normal(kx, (N, Cin, H, W), jnp.float32)
  params = init_params(kp, Cin, Cout)
  fwd = jax.jit(functools.partial(basic_block_pallas, stride=2,
                                  has_downsample=True))
  out = jax.block_until_ready(fwd(x, params))
  ref = ref_basic_block(x, params, 2, True)
  np.testing.assert_allclose(np.asarray(out), np.asarray(ref),
                             rtol=5e-2, atol=5e-2)

  # Case 2: in-stage block — stride 1, pure identity skip.
  x2 = jax.random.normal(kx2, (N, Cout, H, W), jnp.float32)
  params2 = init_params(kp2, Cout, Cout)
  fwd2 = jax.jit(functools.partial(basic_block_pallas, stride=1,
                                   has_downsample=False))
  out2 = jax.block_until_ready(fwd2(x2, params2))
  ref2 = ref_basic_block(x2, params2, 1, False)
  np.testing.assert_allclose(np.asarray(out2), np.asarray(ref2),
                             rtol=5e-2, atol=5e-2)

  print("KERNEL_OK")
</pallas_src>

<mosaic_0001>
module attributes {stable_mosaic.version = 11 : i64} {
  func.func @kernel(%arg0: i32, %arg1: memref<1x36x9x4xbf16, #tpu.memory_space<vmem>>, %arg2: memref<36x8xbf16, #tpu.memory_space<vmem>>, %arg3: memref<1x8xf32, #tpu.memory_space<vmem>>, %arg4: memref<1x8xf32, #tpu.memory_space<vmem>>, %arg5: memref<72x8xbf16, #tpu.memory_space<vmem>>, %arg6: memref<1x8xf32, #tpu.memory_space<vmem>>, %arg7: memref<1x8xf32, #tpu.memory_space<vmem>>, %arg8: memref<4x8xbf16, #tpu.memory_space<vmem>>, %arg9: memref<1x8xf32, #tpu.memory_space<vmem>>, %arg10: memref<1x8xf32, #tpu.memory_space<vmem>>, %arg11: memref<1x8x8x8xf32, #tpu.memory_space<vmem>>, %arg12: memref<10x10x8xf32, #tpu.memory_space<vmem>>) attributes {dimension_semantics = [#tpu.dimension_semantics<parallel>], iteration_bounds = array<i64: 2>, scalar_prefetch = 0 : i64, scratch_operands = 1 : i64, tpu.core_type = #tpu.core_type<tc>, window_params = [{transform_indices = @transform_0, window_bounds = array<i64: 1, 36, 9, 4>}, {pipeline_mode = #tpu.pipeline_mode<synchronous>, transform_indices = @transform_1, window_bounds = array<i64: 36, 8>}, {pipeline_mode = #tpu.pipeline_mode<synchronous>, transform_indices = @transform_2, window_bounds = array<i64: 1, 8>}, {pipeline_mode = #tpu.pipeline_mode<synchronous>, transform_indices = @transform_3, window_bounds = array<i64: 1, 8>}, {pipeline_mode = #tpu.pipeline_mode<synchronous>, transform_indices = @transform_4, window_bounds = array<i64: 72, 8>}, {pipeline_mode = #tpu.pipeline_mode<synchronous>, transform_indices = @transform_5, window_bounds = array<i64: 1, 8>}, {pipeline_mode = #tpu.pipeline_mode<synchronous>, transform_indices = @transform_6, window_bounds = array<i64: 1, 8>}, {pipeline_mode = #tpu.pipeline_mode<synchronous>, transform_indices = @transform_7, window_bounds = array<i64: 4, 8>}, {pipeline_mode = #tpu.pipeline_mode<synchronous>, transform_indices = @transform_8, window_bounds = array<i64: 1, 8>}, {pipeline_mode = #tpu.pipeline_mode<synchronous>, transform_indices = @transform_9, window_bounds = array<i64: 1, 8>}, {transform_indices = @transform_10, window_bounds = array<i64: 1, 8, 8, 8>}]} {
    %c0 = arith.constant 0 : index
    %c0_0 = arith.constant 0 : index
    %c0_1 = arith.constant 0 : index
    %c0_2 = arith.constant 0 : index
    %0 = vector.load %arg1[%c0, %c0_0, %c0_1, %c0_2] : memref<1x36x9x4xbf16, #tpu.memory_space<vmem>>, vector<1x36x9x4xbf16>
    %1 = vector.shape_cast %0 : vector<1x36x9x4xbf16> to vector<36x9x4xbf16>
    %2 = arith.extf %1 : vector<36x9x4xbf16> to vector<36x9x4xf32>
    %3 = vector.extract_strided_slice %2 {offsets = [0, 0, 0], sizes = [8, 8, 4], strides = [1, 1, 1]} : vector<36x9x4xf32> to vector<8x8x4xf32>
    %4 = vector.shape_cast %3 : vector<8x8x4xf32> to vector<64x4xf32>
    %5 = vector.extract_strided_slice %2 {offsets = [9, 0, 0], sizes = [8, 8, 4], strides = [1, 1, 1]} : vector<36x9x4xf32> to vector<8x8x4xf32>
    %6 = vector.shape_cast %5 : vector<8x8x4xf32> to vector<64x4xf32>
    %7 = vector.extract_strided_slice %2 {offsets = [0, 1, 0], sizes = [8, 8, 4], strides = [1, 1, 1]} : vector<36x9x4xf32> to vector<8x8x4xf32>
    %8 = vector.shape_cast %7 : vector<8x8x4xf32> to vector<64x4xf32>
    %9 = vector.extract_strided_slice %2 {offsets = [18, 0, 0], sizes = [8, 8, 4], strides = [1, 1, 1]} : vector<36x9x4xf32> to vector<8x8x4xf32>
    %10 = vector.shape_cast %9 : vector<8x8x4xf32> to vector<64x4xf32>
    %11 = vector.extract_strided_slice %2 {offsets = [27, 0, 0], sizes = [8, 8, 4], strides = [1, 1, 1]} : vector<36x9x4xf32> to vector<8x8x4xf32>
    %12 = vector.shape_cast %11 : vector<8x8x4xf32> to vector<64x4xf32>
    %13 = vector.extract_strided_slice %2 {offsets = [18, 1, 0], sizes = [8, 8, 4], strides = [1, 1, 1]} : vector<36x9x4xf32> to vector<8x8x4xf32>
    %14 = vector.shape_cast %13 : vector<8x8x4xf32> to vector<64x4xf32>
    %15 = vector.extract_strided_slice %2 {offsets = [1, 0, 0], sizes = [8, 8, 4], strides = [1, 1, 1]} : vector<36x9x4xf32> to vector<8x8x4xf32>
    %16 = vector.shape_cast %15 : vector<8x8x4xf32> to vector<64x4xf32>
    %17 = vector.extract_strided_slice %2 {offsets = [10, 0, 0], sizes = [8, 8, 4], strides = [1, 1, 1]} : vector<36x9x4xf32> to vector<8x8x4xf32>
    %18 = vector.shape_cast %17 : vector<8x8x4xf32> to vector<64x4xf32>
    %19 = vector.extract_strided_slice %2 {offsets = [1, 1, 0], sizes = [8, 8, 4], strides = [1, 1, 1]} : vector<36x9x4xf32> to vector<8x8x4xf32>
    %20 = vector.shape_cast %19 : vector<8x8x4xf32> to vector<64x4xf32>
    %21 = tpu.concatenate %4, %6, %8, %10, %12, %14, %16, %18, %20 in 1 : vector<64x4xf32>, vector<64x4xf32>, vector<64x4xf32>, vector<64x4xf32>, vector<64x4xf32>, vector<64x4xf32>, vector<64x4xf32>, vector<64x4xf32>, vector<64x4xf32> -> vector<64x36xf32>
    %22 = arith.truncf %21 : vector<64x36xf32> to vector<64x36xbf16>
    %c0_3 = arith.constant 0 : index
    %c0_4 = arith.constant 0 : index
    %23 = vector.load %arg2[%c0_3, %c0_4] : memref<36x8xbf16, #tpu.memory_space<vmem>>, vector<36x8xbf16>
    %cst = arith.constant dense<0.000000e+00> : vector<64x8xf32>
    %24 = tpu.matmul %22, %23, %cst {dimension_numbers = #tpu.dot_dimension_numbers<[1], [0], [0], [1], [0, 0, 1, 1], [], []>} : vector<64x36xbf16>, vector<36x8xbf16>, vector<64x8xf32> -> vector<64x8xf32>
    %c0_5 = arith.constant 0 : index
    %c0_6 = arith.constant 0 : index
    %25 = vector.load %arg3[%c0_5, %c0_6] : memref<1x8xf32, #tpu.memory_space<vmem>>, vector<1x8xf32>
    %26 = vector.shape_cast %25 : vector<1x8xf32> to vector<8xf32>
    %27 = vector.shape_cast %26 : vector<8xf32> to vector<1x8xf32>
    %28 = vector.broadcast %27 : vector<1x8xf32> to vector<64x8xf32>
    %29 = arith.mulf %24, %28 : vector<64x8xf32>
    %c0_7 = arith.constant 0 : index
    %c0_8 = arith.constant 0 : index
    %30 = vector.load %arg4[%c0_7, %c0_8] : memref<1x8xf32, #tpu.memory_space<vmem>>, vector<1x8xf32>
    %31 = vector.shape_cast %30 : vector<1x8xf32> to vector<8xf32>
    %32 = vector.shape_cast %31 : vector<8xf32> to vector<1x8xf32>
    %33 = vector.broadcast %32 : vector<1x8xf32> to vector<64x8xf32>
    %34 = arith.addf %29, %33 : vector<64x8xf32>
    %cst_9 = arith.constant 0.000000e+00 : f32
    %35 = vector.broadcast %cst_9 : f32 to vector<64x8xf32>
    %36 = arith.maximumf %34, %35 : vector<64x8xf32>
    %cst_10 = arith.constant 0.000000e+00 : f32
    %37 = vector.broadcast %cst_10 : f32 to vector<10x10x8xf32>
    %c0_11 = arith.constant 0 : index
    %c0_12 = arith.constant 0 : index
    %c0_13 = arith.constant 0 : index
    %38 = vector.load %arg12[%c0_11, %c0_12, %c0_13] : memref<10x10x8xf32, #tpu.memory_space<vmem>>, vector<10x10x8xf32>
    tpu.vector_store %arg12[%c0_11, %c0_12, %c0_13], %37 {strides = array<i32>} : memref<10x10x8xf32, #tpu.memory_space<vmem>>, vector<10x10x8xf32>,
    %39 = vector.shape_cast %36 : vector<64x8xf32> to vector<8x8x8xf32>
    %c1 = arith.constant 1 : index
    %c1_14 = arith.constant 1 : index
    %c0_15 = arith.constant 0 : index
    %40 = vector.load %arg12[%c1, %c1_14, %c0_15] : memref<10x10x8xf32, #tpu.memory_space<vmem>>, vector<8x8x8xf32>
    tpu.vector_store %arg12[%c1, %c1_14, %c0_15], %39 {strides = array<i32>} : memref<10x10x8xf32, #tpu.memory_space<vmem>>, vector<8x8x8xf32>,
    %c0_16 = arith.constant 0 : index
    %c0_17 = arith.constant 0 : index
    %c0_18 = arith.constant 0 : index
    %41 = vector.load %arg12[%c0_16, %c0_17, %c0_18] : memref<10x10x8xf32, #tpu.memory_space<vmem>>, vector<10x10x8xf32>
    %42 = vector.extract_strided_slice %41 {offsets = [0, 0, 0], sizes = [8, 8, 8], strides = [1, 1, 1]} : vector<10x10x8xf32> to vector<8x8x8xf32>
    %43 = vector.shape_cast %42 : vector<8x8x8xf32> to vector<64x8xf32>
    %44 = vector.extract_strided_slice %41 {offsets = [0, 1, 0], sizes = [8, 8, 8], strides = [1, 1, 1]} : vector<10x10x8xf32> to vector<8x8x8xf32>
    %45 = vector.shape_cast %44 : vector<8x8x8xf32> to vector<64x8xf32>
    %46 = vector.extract_strided_slice %41 {offsets = [0, 2, 0], sizes = [8, 8, 8], strides = [1, 1, 1]} : vector<10x10x8xf32> to vector<8x8x8xf32>
    %47 = vector.shape_cast %46 : vector<8x8x8xf32> to vector<64x8xf32>
    %48 = vector.extract_strided_slice %41 {offsets = [1, 0, 0], sizes = [8, 8, 8], strides = [1, 1, 1]} : vector<10x10x8xf32> to vector<8x8x8xf32>
    %49 = vector.shape_cast %48 : vector<8x8x8xf32> to vector<64x8xf32>
    %50 = vector.extract_strided_slice %41 {offsets = [1, 1, 0], sizes = [8, 8, 8], strides = [1, 1, 1]} : vector<10x10x8xf32> to vector<8x8x8xf32>
    %51 = vector.shape_cast %50 : vector<8x8x8xf32> to vector<64x8xf32>
    %52 = vector.extract_strided_slice %41 {offsets = [1, 2, 0], sizes = [8, 8, 8], strides = [1, 1, 1]} : vector<10x10x8xf32> to vector<8x8x8xf32>
    %53 = vector.shape_cast %52 : vector<8x8x8xf32> to vector<64x8xf32>
    %54 = vector.extract_strided_slice %41 {offsets = [2, 0, 0], sizes = [8, 8, 8], strides = [1, 1, 1]} : vector<10x10x8xf32> to vector<8x8x8xf32>
    %55 = vector.shape_cast %54 : vector<8x8x8xf32> to vector<64x8xf32>
    %56 = vector.extract_strided_slice %41 {offsets = [2, 1, 0], sizes = [8, 8, 8], strides = [1, 1, 1]} : vector<10x10x8xf32> to vector<8x8x8xf32>
    %57 = vector.shape_cast %56 : vector<8x8x8xf32> to vector<64x8xf32>
    %58 = vector.extract_strided_slice %41 {offsets = [2, 2, 0], sizes = [8, 8, 8], strides = [1, 1, 1]} : vector<10x10x8xf32> to vector<8x8x8xf32>
    %59 = vector.shape_cast %58 : vector<8x8x8xf32> to vector<64x8xf32>
    %60 = tpu.concatenate %43, %45, %47, %49, %51, %53, %55, %57, %59 in 1 : vector<64x8xf32>, vector<64x8xf32>, vector<64x8xf32>, vector<64x8xf32>, vector<64x8xf32>, vector<64x8xf32>, vector<64x8xf32>, vector<64x8xf32>, vector<64x8xf32> -> vector<64x72xf32>
    %61 = arith.truncf %60 : vector<64x72xf32> to vector<64x72xbf16>
    %c0_19 = arith.constant 0 : index
    %c0_20 = arith.constant 0 : index
    %62 = vector.load %arg5[%c0_19, %c0_20] : memref<72x8xbf16, #tpu.memory_space<vmem>>, vector<72x8xbf16>
    %cst_21 = arith.constant dense<0.000000e+00> : vector<64x8xf32>
    %63 = tpu.matmul %61, %62, %cst_21 {dimension_numbers = #tpu.dot_dimension_numbers<[1], [0], [0], [1], [0, 0, 1, 1], [], []>} : vector<64x72xbf16>, vector<72x8xbf16>, vector<64x8xf32> -> vector<64x8xf32>
    %c0_22 = arith.constant 0 : index
    %c0_23 = arith.constant 0 : index
    %64 = vector.load %arg6[%c0_22, %c0_23] : memref<1x8xf32, #tpu.memory_space<vmem>>, vector<1x8xf32>
    %65 = vector.shape_cast %64 : vector<1x8xf32> to vector<8xf32>
    %66 = vector.shape_cast %65 : vector<8xf32> to vector<1x8xf32>
    %67 = vector.broadcast %66 : vector<1x8xf32> to vector<64x8xf32>
    %68 = arith.mulf %63, %67 : vector<64x8xf32>
    %c0_24 = arith.constant 0 : index
    %c0_25 = arith.constant 0 : index
    %69 = vector.load %arg7[%c0_24, %c0_25] : memref<1x8xf32, #tpu.memory_space<vmem>>, vector<1x8xf32>
    %70 = vector.shape_cast %69 : vector<1x8xf32> to vector<8xf32>
    %71 = vector.shape_cast %70 : vector<8xf32> to vector<1x8xf32>
    %72 = vector.broadcast %71 : vector<1x8xf32> to vector<64x8xf32>
    %73 = arith.addf %68, %72 : vector<64x8xf32>
    %74 = vector.extract_strided_slice %2 {offsets = [27, 0, 0], sizes = [8, 8, 4], strides = [1, 1, 1]} : vector<36x9x4xf32> to vector<8x8x4xf32>
    %75 = vector.shape_cast %74 : vector<8x8x4xf32> to vector<64x4xf32>
    %76 = arith.truncf %75 : vector<64x4xf32> to vector<64x4xbf16>
    %c0_26 = arith.constant 0 : index
    %c0_27 = arith.constant 0 : index
    %77 = vector.load %arg8[%c0_26, %c0_27] : memref<4x8xbf16, #tpu.memory_space<vmem>>, vector<4x8xbf16>
    %cst_28 = arith.constant dense<0.000000e+00> : vector<64x8xf32>
    %78 = tpu.matmul %76, %77, %cst_28 {dimension_numbers = #tpu.dot_dimension_numbers<[1], [0], [0], [1], [0, 0, 1, 1], [], []>} : vector<64x4xbf16>, vector<4x8xbf16>, vector<64x8xf32> -> vector<64x8xf32>
    %c0_29 = arith.constant 0 : index
    %c0_30 = arith.constant 0 : index
    %79 = vector.load %arg9[%c0_29, %c0_30] : memref<1x8xf32, #tpu.memory_space<vmem>>, vector<1x8xf32>
    %80 = vector.shape_cast %79 : vector<1x8xf32> to vector<8xf32>
    %81 = vector.shape_cast %80 : vector<8xf32> to vector<1x8xf32>
    %82 = vector.broadcast %81 : vector<1x8xf32> to vector<64x8xf32>
    %83 = arith.mulf %78, %82 : vector<64x8xf32>
    %c0_31 = arith.constant 0 : index
    %c0_32 = arith.constant 0 : index
    %84 = vector.load %arg10[%c0_31, %c0_32] : memref<1x8xf32, #tpu.memory_space<vmem>>, vector<1x8xf32>
    %85 = vector.shape_cast %84 : vector<1x8xf32> to vector<8xf32>
    %86 = vector.shape_cast %85 : vector<8xf32> to vector<1x8xf32>
    %87 = vector.broadcast %86 : vector<1x8xf32> to vector<64x8xf32>
    %88 = arith.addf %83, %87 : vector<64x8xf32>
    %89 = arith.addf %73, %88 : vector<64x8xf32>
    %cst_33 = arith.constant 0.000000e+00 : f32
    %90 = vector.broadcast %cst_33 : f32 to vector<64x8xf32>
    %91 = arith.maximumf %89, %90 : vector<64x8xf32>
    %92 = vector.shape_cast %91 : vector<64x8xf32> to vector<1x8x8x8xf32>
    %c0_34 = arith.constant 0 : index
    %c0_35 = arith.constant 0 : index
    %c0_36 = arith.constant 0 : index
    %c0_37 = arith.constant 0 : index
    %93 = vector.load %arg11[%c0_34, %c0_35, %c0_36, %c0_37] : memref<1x8x8x8xf32, #tpu.memory_space<vmem>>, vector<1x8x8x8xf32>
    tpu.vector_store %arg11[%c0_34, %c0_35, %c0_36, %c0_37], %92 {strides = array<i32>} : memref<1x8x8x8xf32, #tpu.memory_space<vmem>>, vector<1x8x8x8xf32>,
    return
  }
  func.func @transform_0(%arg0: i32) -> (i32, i32, i32, i32) {
    %c0_i32 = arith.constant 0 : i32
    %c0_i32_0 = arith.constant 0 : i32
    %c0_i32_1 = arith.constant 0 : i32
    %c0_i32_2 = arith.constant 0 : i32
    return %arg0, %c0_i32, %c0_i32_0, %c0_i32_1 : i32, i32, i32, i32
  }
  func.func @transform_1(%arg0: i32) -> (i32, i32) {
    %c0_i32 = arith.constant 0 : i32
    %c0_i32_0 = arith.constant 0 : i32
    %c0_i32_1 = arith.constant 0 : i32
    return %c0_i32, %c0_i32_0 : i32, i32
  }
  func.func @transform_2(%arg0: i32) -> (i32, i32) {
    %c0_i32 = arith.constant 0 : i32
    %c0_i32_0 = arith.constant 0 : i32
    %c0_i32_1 = arith.constant 0 : i32
    return %c0_i32, %c0_i32_0 : i32, i32
  }
  func.func @transform_3(%arg0: i32) -> (i32, i32) {
    %c0_i32 = arith.constant 0 : i32
    %c0_i32_0 = arith.constant 0 : i32
    %c0_i32_1 = arith.constant 0 : i32
    return %c0_i32, %c0_i32_0 : i32, i32
  }
  func.func @transform_4(%arg0: i32) -> (i32, i32) {
    %c0_i32 = arith.constant 0 : i32
    %c0_i32_0 = arith.constant 0 : i32
    %c0_i32_1 = arith.constant 0 : i32
    return %c0_i32, %c0_i32_0 : i32, i32
  }
  func.func @transform_5(%arg0: i32) -> (i32, i32) {
    %c0_i32 = arith.constant 0 : i32
    %c0_i32_0 = arith.constant 0 : i32
    %c0_i32_1 = arith.constant 0 : i32
    return %c0_i32, %c0_i32_0 : i32, i32
  }
  func.func @transform_6(%arg0: i32) -> (i32, i32) {
    %c0_i32 = arith.constant 0 : i32
    %c0_i32_0 = arith.constant 0 : i32
    %c0_i32_1 = arith.constant 0 : i32
    return %c0_i32, %c0_i32_0 : i32, i32
  }
  func.func @transform_7(%arg0: i32) -> (i32, i32) {
    %c0_i32 = arith.constant 0 : i32
    %c0_i32_0 = arith.constant 0 : i32
    %c0_i32_1 = arith.constant 0 : i32
    return %c0_i32, %c0_i32_0 : i32, i32
  }
  func.func @transform_8(%arg0: i32) -> (i32, i32) {
    %c0_i32 = arith.constant 0 : i32
    %c0_i32_0 = arith.constant 0 : i32
    %c0_i32_1 = arith.constant 0 : i32
    return %c0_i32, %c0_i32_0 : i32, i32
  }
  func.func @transform_9(%arg0: i32) -> (i32, i32) {
    %c0_i32 = arith.constant 0 : i32
    %c0_i32_0 = arith.constant 0 : i32
    %c0_i32_1 = arith.constant 0 : i32
    return %c0_i32, %c0_i32_0 : i32, i32
  }
  func.func @transform_10(%arg0: i32) -> (i32, i32, i32, i32) {
    %c0_i32 = arith.constant 0 : i32
    %c0_i32_0 = arith.constant 0 : i32
    %c0_i32_1 = arith.constant 0 : i32
    %c0_i32_2 = arith.constant 0 : i32
    return %arg0, %c0_i32, %c0_i32_0, %c0_i32_1 : i32, i32, i32, i32
  }
}

</mosaic_0001>

<llo_original>
// kernel: basic_block_pallas.1
$region0: #{basic_block_pallas.1}
  #allocation0 [shape = 'u32[]', space=smem, size = 0x4, offset = 0x4, fixed_abs, tag = 'smem constant byte address 0x4 - core index']
  #allocation1 [shape = 'u32[144,128]{1,0:T(1,128)}', space=vmem, size = 0x12000, scoped, tag = 'internal scratch']
  #allocation2 [shape = 'f32[10,10,8]{2,1,0:T(8,128)}', space=vmem, size = 0x14000, scoped, tag = 'scratch operand']
  %s0 = inlined_call_operand.vmem [shape: bf16[2,36,9,4], index: 0, kind: input, shape index: {}]
  %s1 = inlined_call_operand.vmem [shape: bf16[36,8], index: 1, kind: input, shape index: {}]
  %s2 = inlined_call_operand.vmem [shape: f32[1,8], index: 2, kind: input, shape index: {}]
  %s3 = inlined_call_operand.vmem [shape: f32[1,8], index: 3, kind: input, shape index: {}]
  %s4 = inlined_call_operand.vmem [shape: bf16[72,8], index: 4, kind: input, shape index: {}]
  %s5 = inlined_call_operand.vmem [shape: f32[1,8], index: 5, kind: input, shape index: {}]
  %s6 = inlined_call_operand.vmem [shape: f32[1,8], index: 6, kind: input, shape index: {}]
  %s7 = inlined_call_operand.vmem [shape: bf16[4,8], index: 7, kind: input, shape index: {}]
  %s8 = inlined_call_operand.vmem [shape: f32[1,8], index: 8, kind: input, shape index: {}]
  %s9 = inlined_call_operand.vmem [shape: f32[1,8], index: 9, kind: input, shape index: {}]
  %s10 = inlined_call_operand.vmem [shape: f32[2,8,8,8], index: 10, kind: output, shape index: {}]
  %s11 = sld [smem:[#allocation0]]
  $region73: #{basic_block_pallas.1} parent=0
    _
  %s13 = ssub.s32 1, %s11
  %s14 = scalar_select 0, %s13, %s11
  loop: start=0, step=1, limit=4
  $region2: #{basic_block_pallas.1} parent=0 // loop_pre_header
    _
  $region3: #{basic_block_pallas.1} parent=0 // loop_header
    %s16 = sphi 0, %s20
    %p17 = scmp.ge.s32.totalorder %s16, 4
    %s26 = sphi 0, %s28
    %s29 = sphi 0, %s26
    %s30 = sphi 0, %s29
    %s46 = sphi 0, %s30
    %s50 = sphi 0, %s50
    %s52 = sphi 0, %s50
    %s53 = sphi 0, %s52
    %s67 = sphi 0, %s53
    %s71 = sphi 0, %s71
    %s73 = sphi 0, %s71
    %s74 = sphi 0, %s73
    %s88 = sphi 0, %s74
    %s92 = sphi 0, %s92
    %s94 = sphi 0, %s92
    %s95 = sphi 0, %s94
    %s109 = sphi 0, %s95
    %s113 = sphi 0, %s113
    %s115 = sphi 0, %s113
    %s116 = sphi 0, %s115
    %s130 = sphi 0, %s116
    %s134 = sphi 0, %s134
    %s136 = sphi 0, %s134
    %s137 = sphi 0, %s136
    %s151 = sphi 0, %s137
    %s155 = sphi 0, %s155
    %s157 = sphi 0, %s155
    %s158 = sphi 0, %s157
    %s172 = sphi 0, %s158
    %s176 = sphi 0, %s176
    %s178 = sphi 0, %s176
    %s179 = sphi 0, %s178
    %s193 = sphi 0, %s179
    %s197 = sphi 0, %s197
    %s199 = sphi 0, %s197
    %s200 = sphi 0, %s199
    %s214 = sphi 0, %s200
    %s218 = sphi 0, %s218
    %s220 = sphi 0, %s218
    %s221 = sphi 0, %s220
    %s235 = sphi 0, %s221
    %s241 = sphi 0, %s243
    %s244 = sphi 0, %s241
    %s245 = sphi 0, %s244
    %s261 = sphi 0, %s245
  $region4: #{basic_block_pallas.1} parent=0 // loop_header_branch
    %19 = sbr.rel (%p17) target = $region8
  $region5: #{basic_block_pallas.1} parent=0 // loop_body
    %s21 = ssub.s32 %s16, 1
    %s22 = ssub.s32 %s16, 2
    %s23 = sadd.s32 %s16, 1
    %s24 = ssub.s32 %s16, %s23
    %p25 = scmp.eq.s32.totalorder %s24, 0
    %s27 = sadd.s32 %s26, 1
    %s28 = scalar_select %p25, %s26, %s27
    %p31 = pneg %p25
    %p32 = scmp.eq.s32.totalorder %s16, 1
    %p33 = por %p31, %p32
    %p34 = scmp.ne.s32.totalorder %s26, %s29
    %p35 = scmp.eq.s32.totalorder %s16, 0
    %p36 = por %p34, %p35
    %p37 = scmp.ne.s32.totalorder %s26, %s29
    %p38 = scmp.eq.s32.totalorder %s21, 1
    %p39 = por %p37, %p38
    %p40 = scmp.ne.s32.totalorder %s29, %s30
    %p41 = scmp.eq.s32.totalorder %s21, 0
    %p42 = por %p40, %p41
    %p43 = scmp.ne.s32.totalorder %s29, %s30
    %p44 = scmp.eq.s32.totalorder %s22, 1
    %p45 = por %p43, %p44
    %p47 = scmp.ne.s32.totalorder %s30, %s46
    %p48 = scmp.eq.s32.totalorder %s22, 0
    %p49 = por %p47, %p48
    %s51 = sadd.s32 %s50, 1
    %p54 = scmp.eq.s32.totalorder %s16, 1
    %p55 = scmp.ne.s32.totalorder %s50, %s52
    %p56 = scmp.eq.s32.totalorder %s16, 0
    %p57 = por %p55, %p56
    %p58 = scmp.ne.s32.totalorder %s50, %s52
    %p59 = scmp.eq.s32.totalorder %s21, 1
    %p60 = por %p58, %p59
    %p61 = scmp.ne.s32.totalorder %s52, %s53
    %p62 = scmp.eq.s32.totalorder %s21, 0
    %p63 = por %p61, %p62
    %p64 = scmp.ne.s32.totalorder %s52, %s53
    %p65 = scmp.eq.s32.totalorder %s22, 1
    %p66 = por %p64, %p65
    %p68 = scmp.ne.s32.totalorder %s53, %s67
    %p69 = scmp.eq.s32.totalorder %s22, 0
    %p70 = por %p68, %p69
    %s72 = sadd.s32 %s71, 1
    %p75 = scmp.eq.s32.totalorder %s16, 1
    %p76 = scmp.ne.s32.totalorder %s71, %s73
    %p77 = scmp.eq.s32.totalorder %s16, 0
    %p78 = por %p76, %p77
    %p79 = scmp.ne.s32.totalorder %s71, %s73
    %p80 = scmp.eq.s32.totalorder %s21, 1
    %p81 = por %p79, %p80
    %p82 = scmp.ne.s32.totalorder %s73, %s74
    %p83 = scmp.eq.s32.totalorder %s21, 0
    %p84 = por %p82, %p83
    %p85 = scmp.ne.s32.totalorder %s73, %s74
    %p86 = scmp.eq.s32.totalorder %s22, 1
    %p87 = por %p85, %p86
    %p89 = scmp.ne.s32.totalorder %s74, %s88
    %p90 = scmp.eq.s32.totalorder %s22, 0
    %p91 = por %p89, %p90
    %s93 = sadd.s32 %s92, 1
    %p96 = scmp.eq.s32.totalorder %s16, 1
    %p97 = scmp.ne.s32.totalorder %s92, %s94
    %p98 = scmp.eq.s32.totalorder %s16, 0
    %p99 = por %p97, %p98
    %p100 = scmp.ne.s32.totalorder %s92, %s94
    %p101 = scmp.eq.s32.totalorder %s21, 1
    %p102 = por %p100, %p101
    %p103 = scmp.ne.s32.totalorder %s94, %s95
    %p104 = scmp.eq.s32.totalorder %s21, 0
    %p105 = por %p103, %p104
    %p106 = scmp.ne.s32.totalorder %s94, %s95
    %p107 = scmp.eq.s32.totalorder %s22, 1
    %p108 = por %p106, %p107
    %p110 = scmp.ne.s32.totalorder %s95, %s109
    %p111 = scmp.eq.s32.totalorder %s22, 0
    %p112 = por %p110, %p111
    %s114 = sadd.s32 %s113, 1
    %p117 = scmp.eq.s32.totalorder %s16, 1
    %p118 = scmp.ne.s32.totalorder %s113, %s115
    %p119 = scmp.eq.s32.totalorder %s16, 0
    %p120 = por %p118, %p119
    %p121 = scmp.ne.s32.totalorder %s113, %s115
    %p122 = scmp.eq.s32.totalorder %s21, 1
    %p123 = por %p121, %p122
    %p124 = scmp.ne.s32.totalorder %s115, %s116
    %p125 = scmp.eq.s32.totalorder %s21, 0
    %p126 = por %p124, %p125
    %p127 = scmp.ne.s32.totalorder %s115, %s116
    %p128 = scmp.eq.s32.totalorder %s22, 1
    %p129 = por %p127, %p128
    %p131 = scmp.ne.s32.totalorder %s116, %s130
    %p132 = scmp.eq.s32.totalorder %s22, 0
    %p133 = por %p131, %p132
    %s135 = sadd.s32 %s134, 1
    %p138 = scmp.eq.s32.totalorder %s16, 1
    %p139 = scmp.ne.s32.totalorder %s134, %s136
    %p140 = scmp.eq.s32.totalorder %s16, 0
    %p141 = por %p139, %p140
    %p142 = scmp.ne.s32.totalorder %s134, %s136
    %p143 = scmp.eq.s32.totalorder %s21, 1
    %p144 = por %p142, %p143
    %p145 = scmp.ne.s32.totalorder %s136, %s137
    %p146 = scmp.eq.s32.totalorder %s21, 0
    %p147 = por %p145, %p146
    %p148 = scmp.ne.s32.totalorder %s136, %s137
    %p149 = scmp.eq.s32.totalorder %s22, 1
    %p150 = por %p148, %p149
    %p152 = scmp.ne.s32.totalorder %s137, %s151
    %p153 = scmp.eq.s32.totalorder %s22, 0
    %p154 = por %p152, %p153
    %s156 = sadd.s32 %s155, 1
    %p159 = scmp.eq.s32.totalorder %s16, 1
    %p160 = scmp.ne.s32.totalorder %s155, %s157
    %p161 = scmp.eq.s32.totalorder %s16, 0
    %p162 = por %p160, %p161
    %p163 = scmp.ne.s32.totalorder %s155, %s157
    %p164 = scmp.eq.s32.totalorder %s21, 1
    %p165 = por %p163, %p164
    %p166 = scmp.ne.s32.totalorder %s157, %s158
    %p167 = scmp.eq.s32.totalorder %s21, 0
    %p168 = por %p166, %p167
    %p169 = scmp.ne.s32.totalorder %s157, %s158
    %p170 = scmp.eq.s32.totalorder %s22, 1
    %p171 = por %p169, %p170
    %p173 = scmp.ne.s32.totalorder %s158, %s172
    %p174 = scmp.eq.s32.totalorder %s22, 0
    %p175 = por %p173, %p174
    %s177 = sadd.s32 %s176, 1
    %p180 = scmp.eq.s32.totalorder %s16, 1
    %p181 = scmp.ne.s32.totalorder %s176, %s178
    %p182 = scmp.eq.s32.totalorder %s16, 0
    %p183 = por %p181, %p182
    %p184 = scmp.ne.s32.totalorder %s176, %s178
    %p185 = scmp.eq.s32.totalorder %s21, 1
    %p186 = por %p184, %p185
    %p187 = scmp.ne.s32.totalorder %s178, %s179
    %p188 = scmp.eq.s32.totalorder %s21, 0
    %p189 = por %p187, %p188
    %p190 = scmp.ne.s32.totalorder %s178, %s179
    %p191 = scmp.eq.s32.totalorder %s22, 1
    %p192 = por %p190, %p191
    %p194 = scmp.ne.s32.totalorder %s179, %s193
    %p195 = scmp.eq.s32.totalorder %s22, 0
    %p196 = por %p194, %p195
    %s198 = sadd.s32 %s197, 1
    %p201 = scmp.eq.s32.totalorder %s16, 1
    %p202 = scmp.ne.s32.totalorder %s197, %s199
    %p203 = scmp.eq.s32.totalorder %s16, 0
    %p204 = por %p202, %p203
    %p205 = scmp.ne.s32.totalorder %s197, %s199
    %p206 = scmp.eq.s32.totalorder %s21, 1
    %p207 = por %p205, %p206
    %p208 = scmp.ne.s32.totalorder %s199, %s200
    %p209 = scmp.eq.s32.totalorder %s21, 0
    %p210 = por %p208, %p209
    %p211 = scmp.ne.s32.totalorder %s199, %s200
    %p212 = scmp.eq.s32.totalorder %s22, 1
    %p213 = por %p211, %p212
    %p215 = scmp.ne.s32.totalorder %s200, %s214
    %p216 = scmp.eq.s32.totalorder %s22, 0
    %p217 = por %p215, %p216
    %s219 = sadd.s32 %s218, 1
    %p222 = scmp.eq.s32.totalorder %s16, 1
    %p223 = scmp.ne.s32.totalorder %s218, %s220
    %p224 = scmp.eq.s32.totalorder %s16, 0
    %p225 = por %p223, %p224
    %p226 = scmp.ne.s32.totalorder %s218, %s220
    %p227 = scmp.eq.s32.totalorder %s21, 1
    %p228 = por %p226, %p227
    %p229 = scmp.ne.s32.totalorder %s220, %s221
    %p230 = scmp.eq.s32.totalorder %s21, 0
    %p231 = por %p229, %p230
    %p232 = scmp.ne.s32.totalorder %s220, %s221
    %p233 = scmp.eq.s32.totalorder %s22, 1
    %p234 = por %p232, %p233
    %p236 = scmp.ne.s32.totalorder %s221, %s235
    %p237 = scmp.eq.s32.totalorder %s22, 0
    %p238 = por %p236, %p237
    %s239 = ssub.s32 %s16, %s23
    %p240 = scmp.eq.s32.totalorder %s239, 0
    %s242 = sadd.s32 %s241, 1
    %s243 = scalar_select %p240, %s241, %s242
    %p246 = pneg %p240
    %p247 = scmp.eq.s32.totalorder %s16, 1
    %p248 = por %p246, %p247
    %p249 = scmp.ne.s32.totalorder %s241, %s244
    %p250 = scmp.eq.s32.totalorder %s16, 0
    %p251 = por %p249, %p250
    %p252 = scmp.ne.s32.totalorder %s241, %s244
    %p253 = scmp.eq.s32.totalorder %s21, 1
    %p254 = por %p252, %p253
    %p255 = scmp.ne.s32.totalorder %s244, %s245
    %p256 = scmp.eq.s32.totalorder %s21, 0
    %p257 = por %p255, %p256
    %p258 = scmp.ne.s32.totalorder %s244, %s245
    %p259 = scmp.eq.s32.totalorder %s22, 1
    %p260 = por %p258, %p259
    %p262 = scmp.ne.s32.totalorder %s245, %s261
    %p263 = scmp.eq.s32.totalorder %s22, 0
    %p264 = por %p262, %p263
    %p265 = scmp.le.s32.totalorder 1, %s16
    %p266 = scmp.lt.s32.totalorder %s16, 3
    %p267 = pnand %p265, %p266
    %p268 = pneg %p267
    // Predicated region
    $region9: #{basic_block_pallas.1} parent=5 // pred_check
      _
    $region10: #{basic_block_pallas.1} parent=5 // pred_check_branch
      %270 = sbr.rel (%p267) target = $region12
    $region11: #{basic_block_pallas.1} parent=5 // pred_region
      %s271 = ssub.s32 %s16, 1
      // Predicated region
      $region13: #{basic_block_pallas.1} parent=11 // pred_check
        %p272 = pneg %p63
      $region14: #{basic_block_pallas.1} parent=11 // pred_check_branch
        %274 = sbr.rel (%p272) target = $region16
      $region15: #{basic_block_pallas.1} parent=11 // pred_region
        _
      $region16: #{basic_block_pallas.1} parent=11 // pred_fallthru
        _
      // Predicated region
      $region17: #{basic_block_pallas.1} parent=11 // pred_check
        %p275 = pneg %p84
      $region18: #{basic_block_pallas.1} parent=11 // pred_check_branch
        %277 = sbr.rel (%p275) target = $region20
      $region19: #{basic_block_pallas.1} parent=11 // pred_region
        _
      $region20: #{basic_block_pallas.1} parent=11 // pred_fallthru
        _
      // Predicated region
      $region21: #{basic_block_pallas.1} parent=11 // pred_check
        %p278 = pneg %p105
      $region22: #{basic_block_pallas.1} parent=11 // pred_check_branch
        %280 = sbr.rel (%p278) target = $region24
      $region23: #{basic_block_pallas.1} parent=11 // pred_region
        _
      $region24: #{basic_block_pallas.1} parent=11 // pred_fallthru
        _
      // Predicated region
      $region25: #{basic_block_pallas.1} parent=11 // pred_check
        %p281 = pneg %p126
      $region26: #{basic_block_pallas.1} parent=11 // pred_check_branch
        %283 = sbr.rel (%p281) target = $region28
      $region27: #{basic_block_pallas.1} parent=11 // pred_region
        _
      $region28: #{basic_block_pallas.1} parent=11 // pred_fallthru
        _
      // Predicated region
      $region29: #{basic_block_pallas.1} parent=11 // pred_check
        %p284 = pneg %p147
      $region30: #{basic_block_pallas.1} parent=11 // pred_check_branch
        %286 = sbr.rel (%p284) target = $region32
      $region31: #{basic_block_pallas.1} parent=11 // pred_region
        _
      $region32: #{basic_block_pallas.1} parent=11 // pred_fallthru
        _
      // Predicated region
      $region33: #{basic_block_pallas.1} parent=11 // pred_check
        %p287 = pneg %p168
      $region34: #{basic_block_pallas.1} parent=11 // pred_check_branch
        %289 = sbr.rel (%p287) target = $region36
      $region35: #{basic_block_pallas.1} parent=11 // pred_region
        _
      $region36: #{basic_block_pallas.1} parent=11 // pred_fallthru
        _
      // Predicated region
      $region37: #{basic_block_pallas.1} parent=11 // pred_check
        %p290 = pneg %p189
      $region38: #{basic_block_pallas.1} parent=11 // pred_check_branch
        %292 = sbr.rel (%p290) target = $region40
      $region39: #{basic_block_pallas.1} parent=11 // pred_region
        _
      $region40: #{basic_block_pallas.1} parent=11 // pred_fallthru
        _
      // Predicated region
      $region41: #{basic_block_pallas.1} parent=11 // pred_check
        %p293 = pneg %p210
      $region42: #{basic_block_pallas.1} parent=11 // pred_check_branch
        %295 = sbr.rel (%p293) target = $region44
      $region43: #{basic_block_pallas.1} parent=11 // pred_region
        _
      $region44: #{basic_block_pallas.1} parent=11 // pred_fallthru
        _
      // Predicated region
      $region45: #{basic_block_pallas.1} parent=11 // pred_check
        %p296 = pneg %p231
      $region46: #{basic_block_pallas.1} parent=11 // pred_check_branch
        %298 = sbr.rel (%p296) target = $region48
      $region47: #{basic_block_pallas.1} parent=11 // pred_region
        _
      $region48: #{basic_block_pallas.1} parent=11 // pred_fallthru
        _
    $region12: #{basic_block_pallas.1} parent=5 // pred_fallthru
      _
    %p299 = scmp.lt.s32.totalorder %s16, 2
    // Predicated region
    $region49: #{basic_block_pallas.1} parent=5 // pred_check
      %p300 = pneg %p299
    $region50: #{basic_block_pallas.1} parent=5 // pred_check_branch
      %302 = sbr.rel (%p300) target = $region52
    $region51: #{basic_block_pallas.1} parent=5 // pred_region
      // Predicated region
      $region53: #{basic_block_pallas.1} parent=51 // pred_check
        %p303 = pneg %p36
      $region54: #{basic_block_pallas.1} parent=51 // pred_check_branch
        %305 = sbr.rel (%p303) target = $region56
      $region55: #{basic_block_pallas.1} parent=51 // pred_region
        %p306 = scmp.lt.s32.totalorder %s16, 1
        %s307 = scalar_select %p306, %s16, 1
        %s308 = smul.addr %s307, 72
        %s309 = smul.addr %s308, 4
        %s310 = scalar_lea.vmem %s0, %s309
      $region56: #{basic_block_pallas.1} parent=51 // pred_fallthru
        _
    $region52: #{basic_block_pallas.1} parent=5 // pred_fallthru
      _
    %p311 = scmp.le.s32.totalorder 1, %s16
    %p312 = scmp.lt.s32.totalorder %s16, 3
    %p313 = pnand %p311, %p312
    %p314 = pneg %p313
    // Predicated region
    $region57: #{basic_block_pallas.1} parent=5 // pred_check
      _
    $region58: #{basic_block_pallas.1} parent=5 // pred_check_branch
      %316 = sbr.rel (%p313) target = $region60
    $region59: #{basic_block_pallas.1} parent=5 // pred_region
      %s317 = ssub.s32 %s16, 1
      %p318 = scmp.lt.s32.totalorder %s21, 1
      %s319 = scalar_select %p318, %s21, 1
      %s320 = smul.addr %s319, 72
      %s321 = smul.addr %s320, 4
      %s322 = scalar_lea.vmem %s0, %s321
      %p323 = pneg %p42
      %p324 = pneg %p39
      %p325 = pneg %p63
      %p326 = pneg %p60
      %p327 = pneg %p84
      %p328 = pneg %p81
      %p329 = pneg %p105
      %p330 = pneg %p102
      %p331 = pneg %p126
      %p332 = pneg %p123
      %p333 = pneg %p147
      %p334 = pneg %p144
      %p335 = pneg %p168
      %p336 = pneg %p165
      %p337 = pneg %p189
      %p338 = pneg %p186
      %p339 = pneg %p210
      %p340 = pneg %p207
      %p341 = pneg %p231
      %p342 = pneg %p228
      %p343 = pneg %p257
      %p344 = pneg %p254
      %p345 = scmp.lt.s32.totalorder %s21, 1
      %s346 = scalar_select %p345, %s21, 1
      %s347 = smul.addr %s346, 8
      %s348 = smul.addr %s347, 8
      %s349 = scalar_lea.vmem %s10, %s348
      %p350 = scmp.lt.s32.totalorder %s21, 1
      %s351 = scalar_select %p350, %s21, 1
      %s352 = smul.addr %s351, 72
      %s353 = smul.addr %s352, 4
      %s354 = scalar_lea.vmem %s0, %s353
      %p355 = scmp.lt.s32.totalorder %s21, 1
      %s356 = scalar_select %p355, %s21, 1
      %s357 = smul.addr %s356, 8
      %s358 = smul.addr %s357, 8
      %s359 = scalar_lea.vmem %s10, %s358
      %v361 = vld [vmem:[%s354] sm:$0xf]
      %v362 = vld [vmem:[%s354 + $0x4] sm:$0x1]
      %v363 = vld [vmem:[%s354 + $0x8] sm:$0xf]
      %v364 = vld [vmem:[%s354 + $0xc] sm:$0x1]
      %v365 = vld [vmem:[%s354 + $0x10] sm:$0xf]
      %v366 = vld [vmem:[%s354 + $0x14] sm:$0x1]
      %v367 = vld [vmem:[%s354 + $0x18] sm:$0xf]
      %v368 = vld [vmem:[%s354 + $0x1c] sm:$0x1]
      %v369 = vld [vmem:[%s354 + $0x20] sm:$0xf]
      %v370 = vld [vmem:[%s354 + $0x24] sm:$0x1]
      %v371 = vld [vmem:[%s354 + $0x28] sm:$0xf]
      %v372 = vld [vmem:[%s354 + $0x2c] sm:$0x1]
      %v373 = vld [vmem:[%s354 + $0x30] sm:$0xf]
      %v374 = vld [vmem:[%s354 + $0x34] sm:$0x1]
      %v375 = vld [vmem:[%s354 + $0x38] sm:$0xf]
      %v376 = vld [vmem:[%s354 + $0x3c] sm:$0x1]
      %v377 = vld [vmem:[%s354 + $0x40] sm:$0xf]
      %v378 = vld [vmem:[%s354 + $0x44] sm:$0x1]
      %v379 = vld [vmem:[%s354 + $0x48] sm:$0xf]
      %v380 = vld [vmem:[%s354 + $0x50] sm:$0xf]
      %v381 = vld [vmem:[%s354 + $0x58] sm:$0xf]
      %v382 = vld [vmem:[%s354 + $0x60] sm:$0xf]
      %v383 = vld [vmem:[%s354 + $0x68] sm:$0xf]
      %v384 = vld [vmem:[%s354 + $0x70] sm:$0xf]
      %v385 = vld [vmem:[%s354 + $0x78] sm:$0xf]
      %v386 = vld [vmem:[%s354 + $0x80] sm:$0xf]
      %v387 = vld [vmem:[%s354 + $0x88] sm:$0xf]
      %v388 = vld [vmem:[%s354 + $0x90] sm:$0xf]
      %v389 = vld [vmem:[%s354 + $0x94] sm:$0x1]
      %v390 = vld [vmem:[%s354 + $0x98] sm:$0xf]
      %v391 = vld [vmem:[%s354 + $0x9c] sm:$0x1]
      %v392 = vld [vmem:[%s354 + $0xa0] sm:$0xf]
      %v393 = vld [vmem:[%s354 + $0xa4] sm:$0x1]
      %v394 = vld [vmem:[%s354 + $0xa8] sm:$0xf]
      %v395 = vld [vmem:[%s354 + $0xac] sm:$0x1]
      %v396 = vld [vmem:[%s354 + $0xb0] sm:$0xf]
      %v397 = vld [vmem:[%s354 + $0xb4] sm:$0x1]
      %v398 = vld [vmem:[%s354 + $0xb8] sm:$0xf]
      %v399 = vld [vmem:[%s354 + $0xbc] sm:$0x1]
      %v400 = vld [vmem:[%s354 + $0xc0] sm:$0xf]
      %v401 = vld [vmem:[%s354 + $0xc4] sm:$0x1]
      %v402 = vld [vmem:[%s354 + $0xc8] sm:$0xf]
      %v403 = vld [vmem:[%s354 + $0xcc] sm:$0x1]
      %v404 = vld [vmem:[%s354 + $0xd8] sm:$0xf]
      %v405 = vld [vmem:[%s354 + $0xe0] sm:$0xf]
      %v406 = vld [vmem:[%s354 + $0xe8] sm:$0xf]
      %v407 = vld [vmem:[%s354 + $0xf0] sm:$0xf]
      %v408 = vld [vmem:[%s354 + $0xf8] sm:$0xf]
      %v409 = vld [vmem:[%s354 + $0x100] sm:$0xf]
      %v410 = vld [vmem:[%s354 + $0x108] sm:$0xf]
      %v411 = vld [vmem:[%s354 + $0x110] sm:$0xf]
      %v412 = vunpack.c.l.bf16 %v361
      %v413 = vunpack.c.l.bf16 %v362
      %v414 = vunpack.c.l.bf16 %v363
      %v415 = vunpack.c.l.bf16 %v364
      %v416 = vunpack.c.l.bf16 %v365
      %v417 = vunpack.c.l.bf16 %v366
      %v418 = vunpack.c.l.bf16 %v367
      %v419 = vunpack.c.l.bf16 %v368
      %v420 = vunpack.c.l.bf16 %v369
      %v421 = vunpack.c.l.bf16 %v370
      %v422 = vunpack.c.l.bf16 %v371
      %v423 = vunpack.c.l.bf16 %v372
      %v424 = vunpack.c.l.bf16 %v373
      %v425 = vunpack.c.l.bf16 %v374
      %v426 = vunpack.c.l.bf16 %v375
      %v427 = vunpack.c.l.bf16 %v376
      %v428 = vunpack.c.l.bf16 %v377
      %v429 = vunpack.c.l.bf16 %v378
      %v430 = vunpack.c.l.bf16 %v379
      %v431 = vunpack.c.l.bf16 %v380
      %v432 = vunpack.c.l.bf16 %v381
      %v433 = vunpack.c.l.bf16 %v382
      %v434 = vunpack.c.l.bf16 %v383
      %v435 = vunpack.c.l.bf16 %v384
      %v436 = vunpack.c.l.bf16 %v385
      %v437 = vunpack.c.l.bf16 %v386
      %v438 = vunpack.c.l.bf16 %v387
      %v439 = vunpack.c.l.bf16 %v388
      %v440 = vunpack.c.l.bf16 %v389
      %v441 = vunpack.c.l.bf16 %v390
      %v442 = vunpack.c.l.bf16 %v391
      %v443 = vunpack.c.l.bf16 %v392
      %v444 = vunpack.c.l.bf16 %v393
      %v445 = vunpack.c.l.bf16 %v394
      %v446 = vunpack.c.l.bf16 %v395
      %v447 = vunpack.c.l.bf16 %v396
      %v448 = vunpack.c.l.bf16 %v397
      %v449 = vunpack.c.l.bf16 %v398
      %v450 = vunpack.c.l.bf16 %v399
      %v451 = vunpack.c.l.bf16 %v400
      %v452 = vunpack.c.l.bf16 %v401
      %v453 = vunpack.c.l.bf16 %v402
      %v454 = vunpack.c.l.bf16 %v403
      %v455 = vunpack.c.l.bf16 %v404
      %v456 = vunpack.c.l.bf16 %v405
      %v457 = vunpack.c.l.bf16 %v406
      %v458 = vunpack.c.l.bf16 %v407
      %v459 = vunpack.c.l.bf16 %v408
      %v460 = vunpack.c.l.bf16 %v409
      %v461 = vunpack.c.l.bf16 %v410
      %v462 = vunpack.c.l.bf16 %v411
      %vm479 = vcmask 1046528
      %v480 = vrot.slane %v412, 1
      %v481 = vrot.slane %v413, 1
      %v482 = vsel %vm479, %v480, %v481
      %v483 = vrot.slane %v414, 1
      %v484 = vrot.slane %v415, 1
      %v485 = vsel %vm479, %v483, %v484
      %v486 = vrot.slane %v416, 1
      %v487 = vrot.slane %v417, 1
      %v488 = vsel %vm479, %v486, %v487
      %v489 = vrot.slane %v418, 1
      %v490 = vrot.slane %v419, 1
      %v491 = vsel %vm479, %v489, %v490
      %v492 = vrot.slane %v420, 1
      %v493 = vrot.slane %v421, 1
      %v494 = vsel %vm479, %v492, %v493
      %v495 = vrot.slane %v422, 1
      %v496 = vrot.slane %v423, 1
      %v497 = vsel %vm479, %v495, %v496
      %v498 = vrot.slane %v424, 1
      %v499 = vrot.slane %v425, 1
      %v500 = vsel %vm479, %v498, %v499
      %v501 = vrot.slane %v426, 1
      %v502 = vrot.slane %v427, 1
      %v503 = vsel %vm479, %v501, %v502
      %v520 = vrot.slane %v439, 1
      %v521 = vrot.slane %v440, 1
      %v522 = vsel %vm479, %v520, %v521
      %v523 = vrot.slane %v441, 1
      %v524 = vrot.slane %v442, 1
      %v525 = vsel %vm479, %v523, %v524
      %v526 = vrot.slane %v443, 1
      %v527 = vrot.slane %v444, 1
      %v528 = vsel %vm479, %v526, %v527
      %v529 = vrot.slane %v445, 1
      %v530 = vrot.slane %v446, 1
      %v531 = vsel %vm479, %v529, %v530
      %v532 = vrot.slane %v447, 1
      %v533 = vrot.slane %v448, 1
      %v534 = vsel %vm479, %v532, %v533
      %v535 = vrot.slane %v449, 1
      %v536 = vrot.slane %v450, 1
      %v537 = vsel %vm479, %v535, %v536
      %v538 = vrot.slane %v451, 1
      %v539 = vrot.slane %v452, 1
      %v540 = vsel %vm479, %v538, %v539
      %v541 = vrot.slane %v453, 1
      %v542 = vrot.slane %v454, 1
      %v543 = vsel %vm479, %v541, %v542
      %v546 = vrot.slane %v428, 1
      %v547 = vrot.slane %v429, 1
      %v548 = vsel %vm479, %v546, %v547
      %557 = vrot.lane.b32.xlu0 %v430, 4
      %v558 = vpop.permute.xlu0 %557
      %559 = vrot.lane.b32.xlu0 %v431, 4
      %v560 = vpop.permute.xlu0 %559
      %561 = vrot.lane.b32.xlu0 %v432, 4
      %v562 = vpop.permute.xlu0 %561
      %563 = vrot.lane.b32.xlu0 %v433, 4
      %v564 = vpop.permute.xlu0 %563
      %565 = vrot.lane.b32.xlu0 %v434, 4
      %v566 = vpop.permute.xlu0 %565
      %567 = vrot.lane.b32.xlu0 %v435, 4
      %v568 = vpop.permute.xlu0 %567
      %569 = vrot.lane.b32.xlu0 %v436, 4
      %v570 = vpop.permute.xlu0 %569
      %571 = vrot.lane.b32.xlu0 %v437, 4
      %v572 = vpop.permute.xlu0 %571
      %581 = vrot.lane.b32.xlu0 %v482, 8
      %v582 = vpop.permute.xlu0 %581
      %583 = vrot.lane.b32.xlu0 %v485, 8
      %v584 = vpop.permute.xlu0 %583
      %585 = vrot.lane.b32.xlu0 %v488, 8
      %v586 = vpop.permute.xlu0 %585
      %587 = vrot.lane.b32.xlu0 %v491, 8
      %v588 = vpop.permute.xlu0 %587
      %589 = vrot.lane.b32.xlu0 %v494, 8
      %v590 = vpop.permute.xlu0 %589
      %591 = vrot.lane.b32.xlu0 %v497, 8
      %v592 = vpop.permute.xlu0 %591
      %593 = vrot.lane.b32.xlu0 %v500, 8
      %v594 = vpop.permute.xlu0 %593
      %595 = vrot.lane.b32.xlu0 %v503, 8
      %v596 = vpop.permute.xlu0 %595
      %605 = vrot.lane.b32.xlu0 %v439, 12
      %v606 = vpop.permute.xlu0 %605
      %607 = vrot.lane.b32.xlu0 %v441, 12
      %v608 = vpop.permute.xlu0 %607
      %609 = vrot.lane.b32.xlu0 %v443, 12
      %v610 = vpop.permute.xlu0 %609
      %611 = vrot.lane.b32.xlu0 %v445, 12
      %v612 = vpop.permute.xlu0 %611
      %613 = vrot.lane.b32.xlu0 %v447, 12
      %v614 = vpop.permute.xlu0 %613
      %615 = vrot.lane.b32.xlu0 %v449, 12
      %v616 = vpop.permute.xlu0 %615
      %617 = vrot.lane.b32.xlu0 %v451, 12
      %v618 = vpop.permute.xlu0 %617
      %619 = vrot.lane.b32.xlu0 %v453, 12
      %v620 = vpop.permute.xlu0 %619
      %637 = vrot.lane.b32.xlu0 %v455, 16
      %v638 = vpop.permute.xlu0 %637
      %639 = vrot.lane.b32.xlu0 %v456, 16
      %v640 = vpop.permute.xlu0 %639
      %641 = vrot.lane.b32.xlu0 %v457, 16
      %v642 = vpop.permute.xlu0 %641
      %643 = vrot.lane.b32.xlu0 %v458, 16
      %v644 = vpop.permute.xlu0 %643
      %645 = vrot.lane.b32.xlu0 %v459, 16
      %v646 = vpop.permute.xlu0 %645
      %647 = vrot.lane.b32.xlu0 %v460, 16
      %v648 = vpop.permute.xlu0 %647
      %649 = vrot.lane.b32.xlu0 %v461, 16
      %v650 = vpop.permute.xlu0 %649
      %651 = vrot.lane.b32.xlu0 %v462, 16
      %v652 = vpop.permute.xlu0 %651
      %661 = vrot.lane.b32.xlu0 %v522, 20
      %v662 = vpop.permute.xlu0 %661
      %663 = vrot.lane.b32.xlu0 %v525, 20
      %v664 = vpop.permute.xlu0 %663
      %665 = vrot.lane.b32.xlu0 %v528, 20
      %v666 = vpop.permute.xlu0 %665
      %667 = vrot.lane.b32.xlu0 %v531, 20
      %v668 = vpop.permute.xlu0 %667
      %669 = vrot.lane.b32.xlu0 %v534, 20
      %v670 = vpop.permute.xlu0 %669
      %671 = vrot.lane.b32.xlu0 %v537, 20
      %v672 = vpop.permute.xlu0 %671
      %673 = vrot.lane.b32.xlu0 %v540, 20
      %v674 = vpop.permute.xlu0 %673
      %675 = vrot.lane.b32.xlu0 %v543, 20
      %v676 = vpop.permute.xlu0 %675
      %685 = vrot.lane.b32.xlu0 %v414, 24
      %v686 = vpop.permute.xlu0 %685
      %687 = vrot.lane.b32.xlu0 %v416, 24
      %v688 = vpop.permute.xlu0 %687
      %689 = vrot.lane.b32.xlu0 %v418, 24
      %v690 = vpop.permute.xlu0 %689
      %691 = vrot.lane.b32.xlu0 %v420, 24
      %v692 = vpop.permute.xlu0 %691
      %693 = vrot.lane.b32.xlu0 %v422, 24
      %v694 = vpop.permute.xlu0 %693
      %695 = vrot.lane.b32.xlu0 %v424, 24
      %v696 = vpop.permute.xlu0 %695
      %697 = vrot.lane.b32.xlu0 %v426, 24
      %v698 = vpop.permute.xlu0 %697
      %699 = vrot.lane.b32.xlu0 %v428, 24
      %v700 = vpop.permute.xlu0 %699
      %710 = vrot.lane.b32.xlu0 %v431, 28
      %v711 = vpop.permute.xlu0 %710
      %712 = vrot.lane.b32.xlu0 %v432, 28
      %v713 = vpop.permute.xlu0 %712
      %714 = vrot.lane.b32.xlu0 %v433, 28
      %v715 = vpop.permute.xlu0 %714
      %716 = vrot.lane.b32.xlu0 %v434, 28
      %v717 = vpop.permute.xlu0 %716
      %718 = vrot.lane.b32.xlu0 %v435, 28
      %v719 = vpop.permute.xlu0 %718
      %720 = vrot.lane.b32.xlu0 %v436, 28
      %v721 = vpop.permute.xlu0 %720
      %722 = vrot.lane.b32.xlu0 %v437, 28
      %v723 = vpop.permute.xlu0 %722
      %724 = vrot.lane.b32.xlu0 %v438, 28
      %v725 = vpop.permute.xlu0 %724
      %734 = vrot.lane.b32.xlu0 %v485, 32
      %v735 = vpop.permute.xlu0 %734
      %736 = vrot.lane.b32.xlu0 %v488, 32
      %v737 = vpop.permute.xlu0 %736
      %738 = vrot.lane.b32.xlu0 %v491, 32
      %v739 = vpop.permute.xlu0 %738
      %740 = vrot.lane.b32.xlu0 %v494, 32
      %v741 = vpop.permute.xlu0 %740
      %742 = vrot.lane.b32.xlu0 %v497, 32
      %v743 = vpop.permute.xlu0 %742
      %744 = vrot.lane.b32.xlu0 %v500, 32
      %v745 = vpop.permute.xlu0 %744
      %746 = vrot.lane.b32.xlu0 %v503, 32
      %v747 = vpop.permute.xlu0 %746
      %748 = vrot.lane.b32.xlu0 %v548, 32
      %v749 = vpop.permute.xlu0 %748
      %vm758 = vcmask 31744
      %v759 = vsel %vm758, %v412, %v558
      %v760 = vsel %vm758, %v414, %v560
      %v761 = vsel %vm758, %v416, %v562
      %v762 = vsel %vm758, %v418, %v564
      %v763 = vsel %vm758, %v420, %v566
      %v764 = vsel %vm758, %v422, %v568
      %v765 = vsel %vm758, %v424, %v570
      %v766 = vsel %vm758, %v426, %v572
      %vm767 = vcmask 64512
      %v768 = vsel %vm767, %v759, %v582
      %v769 = vsel %vm767, %v760, %v584
      %v770 = vsel %vm767, %v761, %v586
      %v771 = vsel %vm767, %v762, %v588
      %v772 = vsel %vm767, %v763, %v590
      %v773 = vsel %vm767, %v764, %v592
      %v774 = vsel %vm767, %v765, %v594
      %v775 = vsel %vm767, %v766, %v596
      %vm776 = vcmask 97280
      %v777 = vsel %vm776, %v768, %v606
      %v778 = vsel %vm776, %v769, %v608
      %v779 = vsel %vm776, %v770, %v610
      %v780 = vsel %vm776, %v771, %v612
      %v781 = vsel %vm776, %v772, %v614
      %v782 = vsel %vm776, %v773, %v616
      %v783 = vsel %vm776, %v774, %v618
      %v784 = vsel %vm776, %v775, %v620
      %vm785 = vcmask 130048
      %v786 = vsel %vm785, %v777, %v638
      %v787 = vsel %vm785, %v778, %v640
      %v788 = vsel %vm785, %v779, %v642
      %v789 = vsel %vm785, %v780, %v644
      %v790 = vsel %vm785, %v781, %v646
      %v791 = vsel %vm785, %v782, %v648
      %v792 = vsel %vm785, %v783, %v650
      %v793 = vsel %vm785, %v784, %v652
      %vm794 = vcmask 162816
      %v795 = vsel %vm794, %v786, %v662
      %v796 = vsel %vm794, %v787, %v664
      %v797 = vsel %vm794, %v788, %v666
      %v798 = vsel %vm794, %v789, %v668
      %v799 = vsel %vm794, %v790, %v670
      %v800 = vsel %vm794, %v791, %v672
      %v801 = vsel %vm794, %v792, %v674
      %v802 = vsel %vm794, %v793, %v676
      %vm803 = vcmask 195584
      %v804 = vsel %vm803, %v795, %v686
      %v805 = vsel %vm803, %v796, %v688
      %v806 = vsel %vm803, %v797, %v690
      %v807 = vsel %vm803, %v798, %v692
      %v808 = vsel %vm803, %v799, %v694
      %v809 = vsel %vm803, %v800, %v696
      %v810 = vsel %vm803, %v801, %v698
      %v811 = vsel %vm803, %v802, %v700
      %vm812 = vcmask 228352
      %v813 = vsel %vm812, %v804, %v711
      %v814 = vsel %vm812, %v805, %v713
      %v815 = vsel %vm812, %v806, %v715
      %v816 = vsel %vm812, %v807, %v717
      %v817 = vsel %vm812, %v808, %v719
      %v818 = vsel %vm812, %v809, %v721
      %v819 = vsel %vm812, %v810, %v723
      %v820 = vsel %vm812, %v811, %v725
      %vm821 = vcmask 261120
      %v822 = vsel %vm821, %v813, %v735
      %v823 = vsel %vm821, %v814, %v737
      %v824 = vsel %vm821, %v815, %v739
      %v825 = vsel %vm821, %v816, %v741
      %v826 = vsel %vm821, %v817, %v743
      %v827 = vsel %vm821, %v818, %v745
      %v828 = vsel %vm821, %v819, %v747
      %v829 = vsel %vm821, %v820, %v749
      %v830 = vpack.c.bf16 %v823, %v822
      %v831 = vpack.c.bf16 %v825, %v824
      %v832 = vpack.c.bf16 %v827, %v826
      %v833 = vpack.c.bf16 %v829, %v828
      %v834 = vld [vmem:[%s1] sm:$0xf]
      %v835 = vld [vmem:[%s1 + $0x4] sm:$0xf]
      %v836 = vld [vmem:[%s1 + $0x8] sm:$0xf]
      %v837 = vld [vmem:[%s1 + $0xc] sm:$0xf]
      %v838 = vld [vmem:[%s1 + $0x10] sm:$0x3]
      %v844 = vunpack.c.l.b16 %v834
      %v845 = vunpack.c.l.b16 %v835
      %v846 = vunpack.c.l.b16 %v836
      %v847 = vunpack.c.l.b16 %v837
      %v848 = vunpack.c.l.b16 %v838
      %v849 = vpack.c.b16 %v845, %v844
      %v850 = vpack.c.b16 %v847, %v846
      %v851 = vpack.c.b16 %v848, %v848
      %vm854 = vcmask 293888
      %v856 = vsel %vm854, %v830, 0
      %v859 = vsel %vm854, %v831, 0
      %v862 = vsel %vm854, %v832, 0
      %v865 = vsel %vm854, %v833, 0
      %vm867 = vcmask 1041408
      %v869 = vsel %vm867, %v851, 0
      %871 = vmatprep.subr.bf16.mxu0 0
      %872 = vmatpush1.bf16.msra.mxu0 %v849
      %873 = vmatprep.subr.bf16.mxu0 0
      %874 = vmatpush1.bf16.msra.mxu0 %v850
      %875 = vmatprep.subr.bf16.mxu0 0
      %876 = vmatpush1.bf16.msra.mxu0 %v869
      %877 = vmatprep.subr.bf16.mxu0 0
      %878 = vmatpush1.bf16.msra.mxu0 0
      %879 = vmatprep.subr.bf16.mxu0 0
      %880 = vmatpush1.bf16.msra.mxu0 0
      %881 = vmatprep.subr.bf16.mxu0 0
      %882 = vmatpush1.bf16.msra.mxu0 0
      %883 = vmatprep.subr.bf16.mxu0 0
      %884 = vmatpush1.bf16.msra.mxu0 0
      %885 = vmatprep.subr.bf16.mxu0 0
      %886 = vmatpush1.bf16.msra.mxu0 0
      %887 = vmatprep.subr.bf16.mxu0 0
      %888 = vmatpush1.bf16.msra.mxu0 0
      %889 = vmatprep.subr.bf16.mxu0 0
      %890 = vmatpush1.bf16.msra.mxu0 0
      %891 = vmatprep.subr.bf16.mxu0 0
      %892 = vmatpush1.bf16.msra.mxu0 0
      %893 = vmatprep.subr.bf16.mxu0 0
      %894 = vmatpush1.bf16.msra.mxu0 0
      %895 = vmatprep.subr.bf16.mxu0 0
      %896 = vmatpush1.bf16.msra.mxu0 0
      %897 = vmatprep.subr.bf16.mxu0 0
      %898 = vmatpush1.bf16.msra.mxu0 0
      %899 = vmatprep.subr.bf16.mxu0 0
      %900 = vmatpush1.bf16.msra.mxu0 0
      %901 = vmatprep.subr.bf16.mxu0 0
      %902 = vmatpush1.bf16.msra.mxu0 0
      %903 = vmatprep.mubr.bf16.mxu0 0
      %904 = vmatmul.mubr.bf16.gmra.mrb[0].mxu0 %v856
      %v905 = vpop.f32.mrb[0].mxu0
      %v906 = vadd.f32 0.0, %v905
      %v907 = vpop.f32.mrb[0].mxu0
      %v908 = vpop.f32.mrb[0].mxu0
      %v909 = vadd.f32 0.0, %v908
      %v910 = vpop.f32.mrb[0].mxu0
      %911 = vmatprep.mubr.bf16.mxu0 0
      %912 = vmatmul.mubr.bf16.gmra.mrb[0].mxu0 %v859
      %v913 = vpop.f32.mrb[0].mxu0
      %v914 = vadd.f32 0.0, %v913
      %v915 = vpop.f32.mrb[0].mxu0
      %v916 = vpop.f32.mrb[0].mxu0
      %v917 = vadd.f32 0.0, %v916
      %v918 = vpop.f32.mrb[0].mxu0
      %919 = vmatprep.mubr.bf16.mxu0 0
      %920 = vmatmul.mubr.bf16.gmra.mrb[0].mxu0 %v862
      %v921 = vpop.f32.mrb[0].mxu0
      %v922 = vadd.f32 0.0, %v921
      %v923 = vpop.f32.mrb[0].mxu0
      %v924 = vpop.f32.mrb[0].mxu0
      %v925 = vadd.f32 0.0, %v924
      %v926 = vpop.f32.mrb[0].mxu0
      %927 = vmatprep.mubr.bf16.mxu0 0
      %928 = vmatmul.mubr.bf16.gmra.mrb[0].mxu0 %v865
      %v929 = vpop.f32.mrb[0].mxu0
      %v930 = vadd.f32 0.0, %v929
      %v931 = vpop.f32.mrb[0].mxu0
      %v932 = vpop.f32.mrb[0].mxu0
      %v933 = vadd.f32 0.0, %v932
      %v934 = vpop.f32.mrb[0].mxu0
      %935 = vdwg.mxu0
      %v936 = vld [vmem:[%s2] sm:$0x1]
      %v938 = vlaneseq
      %v939 = vshrl.u32 %v938, 7
      %v940 = vsub.s32 0, %v939
      %v941 = vrot.slane %v936, %v940
      %v943 = vmul.f32 %v906, %v941
      %v944 = vmul.f32 %v909, %v941
      %v945 = vmul.f32 %v914, %v941
      %v946 = vmul.f32 %v917, %v941
      %v947 = vmul.f32 %v922, %v941
      %v948 = vmul.f32 %v925, %v941
      %v949 = vmul.f32 %v930, %v941
      %v950 = vmul.f32 %v933, %v941
      %v951 = vld [vmem:[%s3] sm:$0x1]
      %v953 = vlaneseq
      %v954 = vshrl.u32 %v953, 7
      %v955 = vsub.s32 0, %v954
      %v956 = vrot.slane %v951, %v955
      %v958 = vadd.f32 %v943, %v956
      %v959 = vadd.f32 %v944, %v956
      %v960 = vadd.f32 %v945, %v956
      %v961 = vadd.f32 %v946, %v956
      %v962 = vadd.f32 %v947, %v956
      %v963 = vadd.f32 %v948, %v956
      %v964 = vadd.f32 %v949, %v956
      %v965 = vadd.f32 %v950, %v956
      %v966 = vmax.f32 %v958, 0.0
      %v967 = vmax.f32 %v959, 0.0
      %v968 = vmax.f32 %v960, 0.0
      %v969 = vmax.f32 %v961, 0.0
      %v970 = vmax.f32 %v962, 0.0
      %v971 = vmax.f32 %v963, 0.0
      %v972 = vmax.f32 %v964, 0.0
      %v973 = vmax.f32 %v965, 0.0
      %974 = vst.msk [vmem:[#allocation2] sm:$0xff] %vm767, 0.0
      %vm975 = vcmask 58368
      %976 = vst.msk [vmem:[#allocation2 + $0x8] sm:$0x3] %vm975, 0.0
      %977 = vst.msk [vmem:[#allocation2 + $0x10] sm:$0xff] %vm767, 0.0
      %978 = vst.msk [vmem:[#allocation2 + $0x18] sm:$0x3] %vm975, 0.0
      %979 = vst.msk [vmem:[#allocation2 + $0x20] sm:$0xff] %vm767, 0.0
      %980 = vst.msk [vmem:[#allocation2 + $0x28] sm:$0x3] %vm975, 0.0
      %981 = vst.msk [vmem:[#allocation2 + $0x30] sm:$0xff] %vm767, 0.0
      %982 = vst.msk [vmem:[#allocation2 + $0x38] sm:$0x3] %vm975, 0.0
      %983 = vst.msk [vmem:[#allocation2 + $0x40] sm:$0xff] %vm767, 0.0
      %984 = vst.msk [vmem:[#allocation2 + $0x48] sm:$0x3] %vm975, 0.0
      %985 = vst.msk [vmem:[#allocation2 + $0x50] sm:$0xff] %vm767, 0.0
      %986 = vst.msk [vmem:[#allocation2 + $0x58] sm:$0x3] %vm975, 0.0
      %987 = vst.msk [vmem:[#allocation2 + $0x60] sm:$0xff] %vm767, 0.0
      %988 = vst.msk [vmem:[#allocation2 + $0x68] sm:$0x3] %vm975, 0.0
      %989 = vst.msk [vmem:[#allocation2 + $0x70] sm:$0xff] %vm767, 0.0
      %990 = vst.msk [vmem:[#allocation2 + $0x78] sm:$0x3] %vm975, 0.0
      %991 = vst.msk [vmem:[#allocation2 + $0x80] sm:$0xff] %vm767, 0.0
      %992 = vst.msk [vmem:[#allocation2 + $0x88] sm:$0x3] %vm975, 0.0
      %993 = vst.msk [vmem:[#allocation2 + $0x90] sm:$0xff] %vm767, 0.0
      %994 = vst.msk [vmem:[#allocation2 + $0x98] sm:$0x3] %vm975, 0.0
      %s995 = scalar_lea.vmem [#allocation2], 16
      %996 = vst.msk [vmem:[%s995 + $0x1] sm:$0xff] %vm767, %v966
      %997 = vst.msk [vmem:[%s995 + $0x11] sm:$0xff] %vm767, %v967
      %998 = vst.msk [vmem:[%s995 + $0x21] sm:$0xff] %vm767, %v968
      %999 = vst.msk [vmem:[%s995 + $0x31] sm:$0xff] %vm767, %v969
      %1000 = vst.msk [vmem:[%s995 + $0x41] sm:$0xff] %vm767, %v970
      %1001 = vst.msk [vmem:[%s995 + $0x51] sm:$0xff] %vm767, %v971
      %1002 = vst.msk [vmem:[%s995 + $0x61] sm:$0xff] %vm767, %v972
      %1003 = vst.msk [vmem:[%s995 + $0x71] sm:$0xff] %vm767, %v973
      %v1004 = vld [vmem:[#allocation2] sm:$0xff]
      %v1005 = vld [vmem:[#allocation2 + $0x8] sm:$0x3]
      %v1006 = vld [vmem:[#allocation2 + $0x10] sm:$0xff]
      %v1007 = vld [vmem:[#allocation2 + $0x18] sm:$0x3]
      %v1008 = vld [vmem:[#allocation2 + $0x20] sm:$0xff]
      %v1009 = vld [vmem:[#allocation2 + $0x28] sm:$0x3]
      %v1010 = vld [vmem:[#allocation2 + $0x30] sm:$0xff]
      %v1011 = vld [vmem:[#allocation2 + $0x38] sm:$0x3]
      %v1012 = vld [vmem:[#allocation2 + $0x40] sm:$0xff]
      %v1013 = vld [vmem:[#allocation2 + $0x48] sm:$0x3]
      %v1014 = vld [vmem:[#allocation2 + $0x50] sm:$0xff]
      %v1015 = vld [vmem:[#allocation2 + $0x58] sm:$0x3]
      %v1016 = vld [vmem:[#allocation2 + $0x60] sm:$0xff]
      %v1017 = vld [vmem:[#allocation2 + $0x68] sm:$0x3]
      %v1018 = vld [vmem:[#allocation2 + $0x70] sm:$0xff]
      %v1019 = vld [vmem:[#allocation2 + $0x78] sm:$0x3]
      %v1020 = vld [vmem:[#allocation2 + $0x80] sm:$0xff]
      %v1021 = vld [vmem:[#allocation2 + $0x88] sm:$0x3]
      %v1022 = vld [vmem:[#allocation2 + $0x90] sm:$0xff]
      %v1023 = vld [vmem:[#allocation2 + $0x98] sm:$0x3]
      %v1040 = vrot.slane %v1004, 1
      %v1041 = vrot.slane %v1005, 1
      %v1042 = vsel %vm479, %v1040, %v1041
      %v1043 = vrot.slane %v1006, 1
      %v1044 = vrot.slane %v1007, 1
      %v1045 = vsel %vm479, %v1043, %v1044
      %v1046 = vrot.slane %v1008, 1
      %v1047 = vrot.slane %v1009, 1
      %v1048 = vsel %vm479, %v1046, %v1047
      %v1049 = vrot.slane %v1010, 1
      %v1050 = vrot.slane %v1011, 1
      %v1051 = vsel %vm479, %v1049, %v1050
      %v1052 = vrot.slane %v1012, 1
      %v1053 = vrot.slane %v1013, 1
      %v1054 = vsel %vm479, %v1052, %v1053
      %v1055 = vrot.slane %v1014, 1
      %v1056 = vrot.slane %v1015, 1
      %v1057 = vsel %vm479, %v1055, %v1056
      %v1058 = vrot.slane %v1016, 1
      %v1059 = vrot.slane %v1017, 1
      %v1060 = vsel %vm479, %v1058, %v1059
      %v1061 = vrot.slane %v1018, 1
      %v1062 = vrot.slane %v1019, 1
      %v1063 = vsel %vm479, %v1061, %v1062
      %vm1064 = vcmask 1045504
      %v1065 = vrot.slane %v1004, 2
      %v1066 = vrot.slane %v1005, 2
      %v1067 = vsel %vm1064, %v1065, %v1066
      %v1068 = vrot.slane %v1006, 2
      %v1069 = vrot.slane %v1007, 2
      %v1070 = vsel %vm1064, %v1068, %v1069
      %v1071 = vrot.slane %v1008, 2
      %v1072 = vrot.slane %v1009, 2
      %v1073 = vsel %vm1064, %v1071, %v1072
      %v1074 = vrot.slane %v1010, 2
      %v1075 = vrot.slane %v1011, 2
      %v1076 = vsel %vm1064, %v1074, %v1075
      %v1077 = vrot.slane %v1012, 2
      %v1078 = vrot.slane %v1013, 2
      %v1079 = vsel %vm1064, %v1077, %v1078
      %v1080 = vrot.slane %v1014, 2
      %v1081 = vrot.slane %v1015, 2
      %v1082 = vsel %vm1064, %v1080, %v1081
      %v1083 = vrot.slane %v1016, 2
      %v1084 = vrot.slane %v1017, 2
      %v1085 = vsel %vm1064, %v1083, %v1084
      %v1086 = vrot.slane %v1018, 2
      %v1087 = vrot.slane %v1019, 2
      %v1088 = vsel %vm1064, %v1086, %v1087
      %v1091 = vrot.slane %v1020, 1
      %v1092 = vrot.slane %v1021, 1
      %v1093 = vsel %vm479, %v1091, %v1092
      %v1094 = vrot.slane %v1020, 2
      %v1095 = vrot.slane %v1021, 2
      %v1096 = vsel %vm1064, %v1094, %v1095
      %v1099 = vrot.slane %v1022, 1
      %v1100 = vrot.slane %v1023, 1
      %v1101 = vsel %vm479, %v1099, %v1100
      %v1102 = vrot.slane %v1022, 2
      %v1103 = vrot.slane %v1023, 2
      %v1104 = vsel %vm1064, %v1102, %v1103
      %1105 = vrot.lane.b32.xlu0 %v1042, 8
      %v1106 = vpop.permute.xlu0 %1105
      %1107 = vrot.lane.b32.xlu0 %v1045, 8
      %v1108 = vpop.permute.xlu0 %1107
      %1109 = vrot.lane.b32.xlu0 %v1048, 8
      %v1110 = vpop.permute.xlu0 %1109
      %1111 = vrot.lane.b32.xlu0 %v1051, 8
      %v1112 = vpop.permute.xlu0 %1111
      %1113 = vrot.lane.b32.xlu0 %v1054, 8
      %v1114 = vpop.permute.xlu0 %1113
      %1115 = vrot.lane.b32.xlu0 %v1057, 8
      %v1116 = vpop.permute.xlu0 %1115
      %1117 = vrot.lane.b32.xlu0 %v1060, 8
      %v1118 = vpop.permute.xlu0 %1117
      %1119 = vrot.lane.b32.xlu0 %v1063, 8
      %v1120 = vpop.permute.xlu0 %1119
      %1129 = vrot.lane.b32.xlu0 %v1067, 16
      %v1130 = vpop.permute.xlu0 %1129
      %1131 = vrot.lane.b32.xlu0 %v1070, 16
      %v1132 = vpop.permute.xlu0 %1131
      %1133 = vrot.lane.b32.xlu0 %v1073, 16
      %v1134 = vpop.permute.xlu0 %1133
      %1135 = vrot.lane.b32.xlu0 %v1076, 16
      %v1136 = vpop.permute.xlu0 %1135
      %1137 = vrot.lane.b32.xlu0 %v1079, 16
      %v1138 = vpop.permute.xlu0 %1137
      %1139 = vrot.lane.b32.xlu0 %v1082, 16
      %v1140 = vpop.permute.xlu0 %1139
      %1141 = vrot.lane.b32.xlu0 %v1085, 16
      %v1142 = vpop.permute.xlu0 %1141
      %1143 = vrot.lane.b32.xlu0 %v1088, 16
      %v1144 = vpop.permute.xlu0 %1143
      %1153 = vrot.lane.b32.xlu0 %v1006, 24
      %v1154 = vpop.permute.xlu0 %1153
      %1155 = vrot.lane.b32.xlu0 %v1008, 24
      %v1156 = vpop.permute.xlu0 %1155
      %1157 = vrot.lane.b32.xlu0 %v1010, 24
      %v1158 = vpop.permute.xlu0 %1157
      %1159 = vrot.lane.b32.xlu0 %v1012, 24
      %v1160 = vpop.permute.xlu0 %1159
      %1161 = vrot.lane.b32.xlu0 %v1014, 24
      %v1162 = vpop.permute.xlu0 %1161
      %1163 = vrot.lane.b32.xlu0 %v1016, 24
      %v1164 = vpop.permute.xlu0 %1163
      %1165 = vrot.lane.b32.xlu0 %v1018, 24
      %v1166 = vpop.permute.xlu0 %1165
      %1167 = vrot.lane.b32.xlu0 %v1020, 24
      %v1168 = vpop.permute.xlu0 %1167
      %1177 = vrot.lane.b32.xlu0 %v1045, 32
      %v1178 = vpop.permute.xlu0 %1177
      %1179 = vrot.lane.b32.xlu0 %v1048, 32
      %v1180 = vpop.permute.xlu0 %1179
      %1181 = vrot.lane.b32.xlu0 %v1051, 32
      %v1182 = vpop.permute.xlu0 %1181
      %1183 = vrot.lane.b32.xlu0 %v1054, 32
      %v1184 = vpop.permute.xlu0 %1183
      %1185 = vrot.lane.b32.xlu0 %v1057, 32
      %v1186 = vpop.permute.xlu0 %1185
      %1187 = vrot.lane.b32.xlu0 %v1060, 32
      %v1188 = vpop.permute.xlu0 %1187
      %1189 = vrot.lane.b32.xlu0 %v1063, 32
      %v1190 = vpop.permute.xlu0 %1189
      %1191 = vrot.lane.b32.xlu0 %v1093, 32
      %v1192 = vpop.permute.xlu0 %1191
      %1201 = vrot.lane.b32.xlu0 %v1070, 40
      %v1202 = vpop.permute.xlu0 %1201
      %1203 = vrot.lane.b32.xlu0 %v1073, 40
      %v1204 = vpop.permute.xlu0 %1203
      %1205 = vrot.lane.b32.xlu0 %v1076, 40
      %v1206 = vpop.permute.xlu0 %1205
      %1207 = vrot.lane.b32.xlu0 %v1079, 40
      %v1208 = vpop.permute.xlu0 %1207
      %1209 = vrot.lane.b32.xlu0 %v1082, 40
      %v1210 = vpop.permute.xlu0 %1209
      %1211 = vrot.lane.b32.xlu0 %v1085, 40
      %v1212 = vpop.permute.xlu0 %1211
      %1213 = vrot.lane.b32.xlu0 %v1088, 40
      %v1214 = vpop.permute.xlu0 %1213
      %1215 = vrot.lane.b32.xlu0 %v1096, 40
      %v1216 = vpop.permute.xlu0 %1215
      %1225 = vrot.lane.b32.xlu0 %v1008, 48
      %v1226 = vpop.permute.xlu0 %1225
      %1227 = vrot.lane.b32.xlu0 %v1010, 48
      %v1228 = vpop.permute.xlu0 %1227
      %1229 = vrot.lane.b32.xlu0 %v1012, 48
      %v1230 = vpop.permute.xlu0 %1229
      %1231 = vrot.lane.b32.xlu0 %v1014, 48
      %v1232 = vpop.permute.xlu0 %1231
      %1233 = vrot.lane.b32.xlu0 %v1016, 48
      %v1234 = vpop.permute.xlu0 %1233
      %1235 = vrot.lane.b32.xlu0 %v1018, 48
      %v1236 = vpop.permute.xlu0 %1235
      %1237 = vrot.lane.b32.xlu0 %v1020, 48
      %v1238 = vpop.permute.xlu0 %1237
      %1239 = vrot.lane.b32.xlu0 %v1022, 48
      %v1240 = vpop.permute.xlu0 %1239
      %1249 = vrot.lane.b32.xlu0 %v1048, 56
      %v1250 = vpop.permute.xlu0 %1249
      %1251 = vrot.lane.b32.xlu0 %v1051, 56
      %v1252 = vpop.permute.xlu0 %1251
      %1253 = vrot.lane.b32.xlu0 %v1054, 56
      %v1254 = vpop.permute.xlu0 %1253
      %1255 = vrot.lane.b32.xlu0 %v1057, 56
      %v1256 = vpop.permute.xlu0 %1255
      %1257 = vrot.lane.b32.xlu0 %v1060, 56
      %v1258 = vpop.permute.xlu0 %1257
      %1259 = vrot.lane.b32.xlu0 %v1063, 56
      %v1260 = vpop.permute.xlu0 %1259
      %1261 = vrot.lane.b32.xlu0 %v1093, 56
      %v1262 = vpop.permute.xlu0 %1261
      %1263 = vrot.lane.b32.xlu0 %v1101, 56
      %v1264 = vpop.permute.xlu0 %1263
      %1273 = vrot.lane.b32.xlu0 %v1073, 64
      %v1274 = vpop.permute.xlu0 %1273
      %1275 = vrot.lane.b32.xlu0 %v1076, 64
      %v1276 = vpop.permute.xlu0 %1275
      %1277 = vrot.lane.b32.xlu0 %v1079, 64
      %v1278 = vpop.permute.xlu0 %1277
      %1279 = vrot.lane.b32.xlu0 %v1082, 64
      %v1280 = vpop.permute.xlu0 %1279
      %1281 = vrot.lane.b32.xlu0 %v1085, 64
      %v1282 = vpop.permute.xlu0 %1281
      %1283 = vrot.lane.b32.xlu0 %v1088, 64
      %v1284 = vpop.permute.xlu0 %1283
      %1285 = vrot.lane.b32.xlu0 %v1096, 64
      %v1286 = vpop.permute.xlu0 %1285
      %1287 = vrot.lane.b32.xlu0 %v1104, 64
      %v1288 = vpop.permute.xlu0 %1287
      %v1297 = vsel %vm767, %v1004, %v1106
      %v1298 = vsel %vm767, %v1006, %v1108
      %v1299 = vsel %vm767, %v1008, %v1110
      %v1300 = vsel %vm767, %v1010, %v1112
      %v1301 = vsel %vm767, %v1012, %v1114
      %v1302 = vsel %vm767, %v1014, %v1116
      %v1303 = vsel %vm767, %v1016, %v1118
      %v1304 = vsel %vm767, %v1018, %v1120
      %v1305 = vsel %vm785, %v1297, %v1130
      %v1306 = vsel %vm785, %v1298, %v1132
      %v1307 = vsel %vm785, %v1299, %v1134
      %v1308 = vsel %vm785, %v1300, %v1136
      %v1309 = vsel %vm785, %v1301, %v1138
      %v1310 = vsel %vm785, %v1302, %v1140
      %v1311 = vsel %vm785, %v1303, %v1142
      %v1312 = vsel %vm785, %v1304, %v1144
      %v1313 = vsel %vm803, %v1305, %v1154
      %v1314 = vsel %vm803, %v1306, %v1156
      %v1315 = vsel %vm803, %v1307, %v1158
      %v1316 = vsel %vm803, %v1308, %v1160
      %v1317 = vsel %vm803, %v1309, %v1162
      %v1318 = vsel %vm803, %v1310, %v1164
      %v1319 = vsel %vm803, %v1311, %v1166
      %v1320 = vsel %vm803, %v1312, %v1168
      %v1321 = vsel %vm821, %v1313, %v1178
      %v1322 = vsel %vm821, %v1314, %v1180
      %v1323 = vsel %vm821, %v1315, %v1182
      %v1324 = vsel %vm821, %v1316, %v1184
      %v1325 = vsel %vm821, %v1317, %v1186
      %v1326 = vsel %vm821, %v1318, %v1188
      %v1327 = vsel %vm821, %v1319, %v1190
      %v1328 = vsel %vm821, %v1320, %v1192
      %vm1329 = vcmask 326656
      %v1330 = vsel %vm1329, %v1321, %v1202
      %v1331 = vsel %vm1329, %v1322, %v1204
      %v1332 = vsel %vm1329, %v1323, %v1206
      %v1333 = vsel %vm1329, %v1324, %v1208
      %v1334 = vsel %vm1329, %v1325, %v1210
      %v1335 = vsel %vm1329, %v1326, %v1212
      %v1336 = vsel %vm1329, %v1327, %v1214
      %v1337 = vsel %vm1329, %v1328, %v1216
      %vm1338 = vcmask 392192
      %v1339 = vsel %vm1338, %v1330, %v1226
      %v1340 = vsel %vm1338, %v1331, %v1228
      %v1341 = vsel %vm1338, %v1332, %v1230
      %v1342 = vsel %vm1338, %v1333, %v1232
      %v1343 = vsel %vm1338, %v1334, %v1234
      %v1344 = vsel %vm1338, %v1335, %v1236
      %v1345 = vsel %vm1338, %v1336, %v1238
      %v1346 = vsel %vm1338, %v1337, %v1240
      %vm1347 = vcmask 457728
      %v1348 = vsel %vm1347, %v1339, %v1250
      %v1349 = vsel %vm1347, %v1340, %v1252
      %v1350 = vsel %vm1347, %v1341, %v1254
      %v1351 = vsel %vm1347, %v1342, %v1256
      %v1352 = vsel %vm1347, %v1343, %v1258
      %v1353 = vsel %vm1347, %v1344, %v1260
      %v1354 = vsel %vm1347, %v1345, %v1262
      %v1355 = vsel %vm1347, %v1346, %v1264
      %vm1356 = vcmask 523264
      %v1357 = vsel %vm1356, %v1348, %v1274
      %v1358 = vsel %vm1356, %v1349, %v1276
      %v1359 = vsel %vm1356, %v1350, %v1278
      %v1360 = vsel %vm1356, %v1351, %v1280
      %v1361 = vsel %vm1356, %v1352, %v1282
      %v1362 = vsel %vm1356, %v1353, %v1284
      %v1363 = vsel %vm1356, %v1354, %v1286
      %v1364 = vsel %vm1356, %v1355, %v1288
      %v1365 = vpack.c.bf16 %v1358, %v1357
      %v1366 = vpack.c.bf16 %v1360, %v1359
      %v1367 = vpack.c.bf16 %v1362, %v1361
      %v1368 = vpack.c.bf16 %v1364, %v1363
      %v1369 = vld [vmem:[%s4] sm:$0xf]
      %v1370 = vld [vmem:[%s4 + $0x4] sm:$0xf]
      %v1371 = vld [vmem:[%s4 + $0x8] sm:$0xf]
      %v1372 = vld [vmem:[%s4 + $0xc] sm:$0xf]
      %v1373 = vld [vmem:[%s4 + $0x10] sm:$0xf]
      %v1374 = vld [vmem:[%s4 + $0x14] sm:$0xf]
      %v1375 = vld [vmem:[%s4 + $0x18] sm:$0xf]
      %v1376 = vld [vmem:[%s4 + $0x1c] sm:$0xf]
      %v1377 = vld [vmem:[%s4 + $0x20] sm:$0xf]
      %v1387 = vunpack.c.l.b16 %v1369
      %v1388 = vunpack.c.l.b16 %v1370
      %v1389 = vunpack.c.l.b16 %v1371
      %v1390 = vunpack.c.l.b16 %v1372
      %v1391 = vunpack.c.l.b16 %v1373
      %v1392 = vunpack.c.l.b16 %v1374
      %v1393 = vunpack.c.l.b16 %v1375
      %v1394 = vunpack.c.l.b16 %v1376
      %v1395 = vunpack.c.l.b16 %v1377
      %v1396 = vpack.c.b16 %v1388, %v1387
      %v1397 = vpack.c.b16 %v1390, %v1389
      %v1398 = vpack.c.b16 %v1392, %v1391
      %v1399 = vpack.c.b16 %v1394, %v1393
      %v1400 = vpack.c.b16 %v1395, %v1395
      %vm1405 = vcmask 588800
      %v1407 = vsel %vm1405, %v1365, 0
      %v1410 = vsel %vm1405, %v1366, 0
      %v1413 = vsel %vm1405, %v1367, 0
      %v1416 = vsel %vm1405, %v1368, 0
      %vm1418 = vcmask 1043456
      %v1420 = vsel %vm1418, %v1400, 0
      %1422 = vmatprep.subr.bf16.mxu0 0
      %1423 = vmatpush1.bf16.msra.mxu0 %v1396
      %1424 = vmatprep.subr.bf16.mxu0 0
      %1425 = vmatpush1.bf16.msra.mxu0 %v1397
      %1426 = vmatprep.subr.bf16.mxu0 0
      %1427 = vmatpush1.bf16.msra.mxu0 %v1398
      %1428 = vmatprep.subr.bf16.mxu0 0
      %1429 = vmatpush1.bf16.msra.mxu0 %v1399
      %1430 = vmatprep.subr.bf16.mxu0 0
      %1431 = vmatpush1.bf16.msra.mxu0 %v1420
      %1432 = vmatprep.subr.bf16.mxu0 0
      %1433 = vmatpush1.bf16.msra.mxu0 0
      %1434 = vmatprep.subr.bf16.mxu0 0
      %1435 = vmatpush1.bf16.msra.mxu0 0
      %1436 = vmatprep.subr.bf16.mxu0 0
      %1437 = vmatpush1.bf16.msra.mxu0 0
      %1438 = vmatprep.subr.bf16.mxu0 0
      %1439 = vmatpush1.bf16.msra.mxu0 0
      %1440 = vmatprep.subr.bf16.mxu0 0
      %1441 = vmatpush1.bf16.msra.mxu0 0
      %1442 = vmatprep.subr.bf16.mxu0 0
      %1443 = vmatpush1.bf16.msra.mxu0 0
      %1444 = vmatprep.subr.bf16.mxu0 0
      %1445 = vmatpush1.bf16.msra.mxu0 0
      %1446 = vmatprep.subr.bf16.mxu0 0
      %1447 = vmatpush1.bf16.msra.mxu0 0
      %1448 = vmatprep.subr.bf16.mxu0 0
      %1449 = vmatpush1.bf16.msra.mxu0 0
      %1450 = vmatprep.subr.bf16.mxu0 0
      %1451 = vmatpush1.bf16.msra.mxu0 0
      %1452 = vmatprep.subr.bf16.mxu0 0
      %1453 = vmatpush1.bf16.msra.mxu0 0
      %1454 = vmatprep.mubr.bf16.mxu0 0
      %1455 = vmatmul.mubr.bf16.gmra.mrb[0].mxu0 %v1407
      %v1456 = vpop.f32.mrb[0].mxu0
      %v1457 = vadd.f32 0.0, %v1456
      %v1458 = vpop.f32.mrb[0].mxu0
      %v1459 = vpop.f32.mrb[0].mxu0
      %v1460 = vadd.f32 0.0, %v1459
      %v1461 = vpop.f32.mrb[0].mxu0
      %1462 = vmatprep.mubr.bf16.mxu0 0
      %1463 = vmatmul.mubr.bf16.gmra.mrb[0].mxu0 %v1410
      %v1464 = vpop.f32.mrb[0].mxu0
      %v1465 = vadd.f32 0.0, %v1464
      %v1466 = vpop.f32.mrb[0].mxu0
      %v1467 = vpop.f32.mrb[0].mxu0
      %v1468 = vadd.f32 0.0, %v1467
      %v1469 = vpop.f32.mrb[0].mxu0
      %1470 = vmatprep.mubr.bf16.mxu0 0
      %1471 = vmatmul.mubr.bf16.gmra.mrb[0].mxu0 %v1413
      %v1472 = vpop.f32.mrb[0].mxu0
      %v1473 = vadd.f32 0.0, %v1472
      %v1474 = vpop.f32.mrb[0].mxu0
      %v1475 = vpop.f32.mrb[0].mxu0
      %v1476 = vadd.f32 0.0, %v1475
      %v1477 = vpop.f32.mrb[0].mxu0
      %1478 = vmatprep.mubr.bf16.mxu0 0
      %1479 = vmatmul.mubr.bf16.gmra.mrb[0].mxu0 %v1416
      %v1480 = vpop.f32.mrb[0].mxu0
      %v1481 = vadd.f32 0.0, %v1480
      %v1482 = vpop.f32.mrb[0].mxu0
      %v1483 = vpop.f32.mrb[0].mxu0
      %v1484 = vadd.f32 0.0, %v1483
      %v1485 = vpop.f32.mrb[0].mxu0
      %1486 = vdwg.mxu0
      %v1487 = vld [vmem:[%s5] sm:$0x1]
      %v1489 = vlaneseq
      %v1490 = vshrl.u32 %v1489, 7
      %v1491 = vsub.s32 0, %v1490
      %v1492 = vrot.slane %v1487, %v1491
      %v1494 = vmul.f32 %v1457, %v1492
      %v1495 = vmul.f32 %v1460, %v1492
      %v1496 = vmul.f32 %v1465, %v1492
      %v1497 = vmul.f32 %v1468, %v1492
      %v1498 = vmul.f32 %v1473, %v1492
      %v1499 = vmul.f32 %v1476, %v1492
      %v1500 = vmul.f32 %v1481, %v1492
      %v1501 = vmul.f32 %v1484, %v1492
      %v1502 = vld [vmem:[%s6] sm:$0x1]
      %v1504 = vlaneseq
      %v1505 = vshrl.u32 %v1504, 7
      %v1506 = vsub.s32 0, %v1505
      %v1507 = vrot.slane %v1502, %v1506
      %v1509 = vadd.f32 %v1494, %v1507
      %v1510 = vadd.f32 %v1495, %v1507
      %v1511 = vadd.f32 %v1496, %v1507
      %v1512 = vadd.f32 %v1497, %v1507
      %v1513 = vadd.f32 %v1498, %v1507
      %v1514 = vadd.f32 %v1499, %v1507
      %v1515 = vadd.f32 %v1500, %v1507
      %v1516 = vadd.f32 %v1501, %v1507
      %v1517 = vpack.c.bf16 %v456, %v455
      %v1518 = vpack.c.bf16 %v458, %v457
      %v1519 = vpack.c.bf16 %v460, %v459
      %v1520 = vpack.c.bf16 %v462, %v461
      %v1521 = vld [vmem:[%s7] sm:$0x3]
      %v1523 = vsel %vm758, %v1517, 0
      %v1526 = vsel %vm758, %v1518, 0
      %v1529 = vsel %vm758, %v1519, 0
      %v1532 = vsel %vm758, %v1520, 0
      %v1535 = vsel %vm867, %v1521, 0
      %1537 = vmatprep.subr.bf16.mxu0 0
      %1538 = vmatpush1.bf16.msra.mxu0 %v1535
      %1539 = vmatprep.subr.bf16.mxu0 0
      %1540 = vmatpush1.bf16.msra.mxu0 0
      %1541 = vmatprep.subr.bf16.mxu0 0
      %1542 = vmatpush1.bf16.msra.mxu0 0
      %1543 = vmatprep.subr.bf16.mxu0 0
      %1544 = vmatpush1.bf16.msra.mxu0 0
      %1545 = vmatprep.subr.bf16.mxu0 0
      %1546 = vmatpush1.bf16.msra.mxu0 0
      %1547 = vmatprep.subr.bf16.mxu0 0
      %1548 = vmatpush1.bf16.msra.mxu0 0
      %1549 = vmatprep.subr.bf16.mxu0 0
      %1550 = vmatpush1.bf16.msra.mxu0 0
      %1551 = vmatprep.subr.bf16.mxu0 0
      %1552 = vmatpush1.bf16.msra.mxu0 0
      %1553 = vmatprep.subr.bf16.mxu0 0
      %1554 = vmatpush1.bf16.msra.mxu0 0
      %1555 = vmatprep.subr.bf16.mxu0 0
      %1556 = vmatpush1.bf16.msra.mxu0 0
      %1557 = vmatprep.subr.bf16.mxu0 0
      %1558 = vmatpush1.bf16.msra.mxu0 0
      %1559 = vmatprep.subr.bf16.mxu0 0
      %1560 = vmatpush1.bf16.msra.mxu0 0
      %1561 = vmatprep.subr.bf16.mxu0 0
      %1562 = vmatpush1.bf16.msra.mxu0 0
      %1563 = vmatprep.subr.bf16.mxu0 0
      %1564 = vmatpush1.bf16.msra.mxu0 0
      %1565 = vmatprep.subr.bf16.mxu0 0
      %1566 = vmatpush1.bf16.msra.mxu0 0
      %1567 = vmatprep.subr.bf16.mxu0 0
      %1568 = vmatpush1.bf16.msra.mxu0 0
      %1569 = vmatprep.mubr.bf16.mxu0 0
      %1570 = vmatmul.mubr.bf16.gmra.mrb[0].mxu0 %v1523
      %v1571 = vpop.f32.mrb[0].mxu0
      %v1572 = vadd.f32 0.0, %v1571
      %v1573 = vpop.f32.mrb[0].mxu0
      %v1574 = vpop.f32.mrb[0].mxu0
      %v1575 = vadd.f32 0.0, %v1574
      %v1576 = vpop.f32.mrb[0].mxu0
      %1577 = vmatprep.mubr.bf16.mxu0 0
      %1578 = vmatmul.mubr.bf16.gmra.mrb[0].mxu0 %v1526
      %v1579 = vpop.f32.mrb[0].mxu0
      %v1580 = vadd.f32 0.0, %v1579
      %v1581 = vpop.f32.mrb[0].mxu0
      %v1582 = vpop.f32.mrb[0].mxu0
      %v1583 = vadd.f32 0.0, %v1582
      %v1584 = vpop.f32.mrb[0].mxu0
      %1585 = vmatprep.mubr.bf16.mxu0 0
      %1586 = vmatmul.mubr.bf16.gmra.mrb[0].mxu0 %v1529
      %v1587 = vpop.f32.mrb[0].mxu0
      %v1588 = vadd.f32 0.0, %v1587
      %v1589 = vpop.f32.mrb[0].mxu0
      %v1590 = vpop.f32.mrb[0].mxu0
      %v1591 = vadd.f32 0.0, %v1590
      %v1592 = vpop.f32.mrb[0].mxu0
      %1593 = vmatprep.mubr.bf16.mxu0 0
      %1594 = vmatmul.mubr.bf16.gmra.mrb[0].mxu0 %v1532
      %v1595 = vpop.f32.mrb[0].mxu0
      %v1596 = vadd.f32 0.0, %v1595
      %v1597 = vpop.f32.mrb[0].mxu0
      %v1598 = vpop.f32.mrb[0].mxu0
      %v1599 = vadd.f32 0.0, %v1598
      %v1600 = vpop.f32.mrb[0].mxu0
      %1601 = vdwg.mxu0
      %v1602 = vld [vmem:[%s8] sm:$0x1]
      %v1604 = vlaneseq
      %v1605 = vshrl.u32 %v1604, 7
      %v1606 = vsub.s32 0, %v1605
      %v1607 = vrot.slane %v1602, %v1606
      %v1609 = vmul.f32 %v1572, %v1607
      %v1610 = vmul.f32 %v1575, %v1607
      %v1611 = vmul.f32 %v1580, %v1607
      %v1612 = vmul.f32 %v1583, %v1607
      %v1613 = vmul.f32 %v1588, %v1607
      %v1614 = vmul.f32 %v1591, %v1607
      %v1615 = vmul.f32 %v1596, %v1607
      %v1616 = vmul.f32 %v1599, %v1607
      %v1617 = vld [vmem:[%s9] sm:$0x1]
      %v1619 = vlaneseq
      %v1620 = vshrl.u32 %v1619, 7
      %v1621 = vsub.s32 0, %v1620
      %v1622 = vrot.slane %v1617, %v1621
      %v1624 = vadd.f32 %v1609, %v1622
      %v1625 = vadd.f32 %v1610, %v1622
      %v1626 = vadd.f32 %v1611, %v1622
      %v1627 = vadd.f32 %v1612, %v1622
      %v1628 = vadd.f32 %v1613, %v1622
      %v1629 = vadd.f32 %v1614, %v1622
      %v1630 = vadd.f32 %v1615, %v1622
      %v1631 = vadd.f32 %v1616, %v1622
      %v1632 = vadd.f32 %v1509, %v1624
      %v1633 = vadd.f32 %v1510, %v1625
      %v1634 = vadd.f32 %v1511, %v1626
      %v1635 = vadd.f32 %v1512, %v1627
      %v1636 = vadd.f32 %v1513, %v1628
      %v1637 = vadd.f32 %v1514, %v1629
      %v1638 = vadd.f32 %v1515, %v1630
      %v1639 = vadd.f32 %v1516, %v1631
      %v1640 = vmax.f32 %v1632, 0.0
      %v1641 = vmax.f32 %v1633, 0.0
      %v1642 = vmax.f32 %v1634, 0.0
      %v1643 = vmax.f32 %v1635, 0.0
      %v1644 = vmax.f32 %v1636, 0.0
      %v1645 = vmax.f32 %v1637, 0.0
      %v1646 = vmax.f32 %v1638, 0.0
      %v1647 = vmax.f32 %v1639, 0.0
      %1648 = vst.msk [vmem:[%s359] sm:$0xff] %vm767, %v1640
      %1649 = vst.msk [vmem:[%s359 + $0x8] sm:$0xff] %vm767, %v1641
      %1650 = vst.msk [vmem:[%s359 + $0x10] sm:$0xff] %vm767, %v1642
      %1651 = vst.msk [vmem:[%s359 + $0x18] sm:$0xff] %vm767, %v1643
      %1652 = vst.msk [vmem:[%s359 + $0x20] sm:$0xff] %vm767, %v1644
      %1653 = vst.msk [vmem:[%s359 + $0x28] sm:$0xff] %vm767, %v1645
      %1654 = vst.msk [vmem:[%s359 + $0x30] sm:$0xff] %vm767, %v1646
      %1655 = vst.msk [vmem:[%s359 + $0x38] sm:$0xff] %vm767, %v1647
      %p1656 = scmp.lt.s32.totalorder %s21, 1
      %s1657 = scalar_select %p1656, %s21, 1
      %s1658 = smul.addr %s1657, 8
      %s1659 = smul.addr %s1658, 8
      %s1660 = scalar_lea.vmem %s10, %s1659
      // Predicated region
      $region61: #{basic_block_pallas.1} parent=59 // pred_check
        %p1661 = pneg %p254
      $region62: #{basic_block_pallas.1} parent=59 // pred_check_branch
        %1663 = sbr.rel (%p1661) target = $region64
      $region63: #{basic_block_pallas.1} parent=59 // pred_region
        _
      $region64: #{basic_block_pallas.1} parent=59 // pred_fallthru
        _
    $region60: #{basic_block_pallas.1} parent=5 // pred_fallthru
      _
    %p1664 = scmp.le.s32.totalorder 2, %s16
    // Predicated region
    $region65: #{basic_block_pallas.1} parent=5 // pred_check
      %p1665 = pneg %p1664
    $region66: #{basic_block_pallas.1} parent=5 // pred_check_branch
      %1667 = sbr.rel (%p1665) target = $region68
    $region67: #{basic_block_pallas.1} parent=5 // pred_region
      %s1668 = ssub.s32 %s16, 2
      // Predicated region
      $region69: #{basic_block_pallas.1} parent=67 // pred_check
        %p1669 = pneg %p260
      $region70: #{basic_block_pallas.1} parent=67 // pred_check_branch
        %1671 = sbr.rel (%p1669) target = $region72
      $region71: #{basic_block_pallas.1} parent=67 // pred_region
        %p1672 = scmp.lt.s32.totalorder %s22, 1
        %s1673 = scalar_select %p1672, %s22, 1
        %s1674 = smul.addr %s1673, 8
        %s1675 = smul.addr %s1674, 8
        %s1676 = scalar_lea.vmem %s10, %s1675
      $region72: #{basic_block_pallas.1} parent=67 // pred_fallthru
        _
    $region68: #{basic_block_pallas.1} parent=5 // pred_fallthru
      _
  $region6: #{basic_block_pallas.1} parent=0 // loop_footer
    %s20 = sadd.s32 1, %s16
  $region7: #{basic_block_pallas.1} parent=0 // loop_footer_branch
    %15 = sbr.rel target = $region3
  $region8: #{basic_block_pallas.1} parent=0 // loop_exit
    _

</llo_original>
